<compile_context>
chip_gen: v7x
topology: tpu7x:2x2x1
jax: 0.10.0
libtpu: 0.0.40
codegen_flags: <defaults>
</compile_context>

<pallas_src>
import jax
import jax.numpy as jnp
from jax.experimental import pallas as pl
from jax.experimental.pallas import tpu as pltpu


# ---------------------------------------------------------------------------
# Kernel: full SelfAttention forward for one batch tile
# ---------------------------------------------------------------------------
def _self_attention_kernel(x_ref, w1_ref, b1_ref, w2_ref, b2_ref,
                           out_ref, wts_ref):
    bt, n, h = x_ref.shape
    k = w1_ref.shape[1]                                   # 64
    x = x_ref[...]                                        # (bt, n, h) f32

    # --- projection[0]: Linear(H, 64) + ReLU on the MXU, M = bt*n rows ------
    e = jnp.dot(x.reshape(bt * n, h), w1_ref[...],
                preferred_element_type=jnp.float32) + b1_ref[...]
    e = jnp.maximum(e, 0.0).reshape(bt, n, k)             # (bt, n, 64)

    # --- projection[2]: Linear(64, 1) as VPU multiply + lane reduction ------
    # (avoids a 1-column MXU matmul and its narrow (.,1) result tile)
    energy = jnp.sum(e * w2_ref[...], axis=-1, keepdims=True) + b2_ref[...]  # (bt, n, 1)

    # --- softmax over the N positions (torch dim=1) --------------------------
    m = jnp.max(energy, axis=1, keepdims=True)            # (bt, 1, 1)
    p = jnp.exp(energy - m)                               # (bt, n, 1)
    w = p / jnp.sum(p, axis=1, keepdims=True)             # (bt, n, 1)

    # --- outputs = (encoder_outputs * weights.unsqueeze(-1)).sum(dim=1) ------
    out_ref[...] = jnp.sum(x * w, axis=1)                 # (bt, h)
    wts_ref[...] = w                                      # (bt, n, 1)


# ---------------------------------------------------------------------------
# Wrapper
# ---------------------------------------------------------------------------
def _pick_block_b(batch, n, target_rows=256):
    """Largest batch tile whose rows (tile*n) stay near the MXU-friendly target
    and that divides the batch (so the grid has no remainder)."""
    bb = max(1, min(batch, target_rows // max(n, 1)))
    while batch % bb:
        bb -= 1
    return bb


def self_attention(x, w1, b1, w2, b2, *, block_b=None):
    """x: (B, N, H) f32 encoder outputs.
    w1: (H, 64) (Linear(H,64).weight transposed), b1: (1, 64),
    w2: (1, 64) (Linear(64,1).weight as a row),    b2: (1, 1).
    Returns (outputs (B, H), weights (B, N))."""
    B, N, H = x.shape
    K = w1.shape[1]
    if block_b is None:
        block_b = _pick_block_b(B, N)
    assert B % block_b == 0, "batch must be divisible by the batch tile"

    const2 = lambda i: (0, 0)
    outputs, weights3 = pl.pallas_call(
        _self_attention_kernel,
        grid=(B // block_b,),
        in_specs=[
            pl.BlockSpec((block_b, N, H), lambda i: (i, 0, 0)),   # x tile
            pl.BlockSpec((H, K), const2),                         # w1 (resident)
            pl.BlockSpec((1, K), const2),                         # b1
            pl.BlockSpec((1, K), const2),                         # w2 row
            pl.BlockSpec((1, 1), const2),                         # b2
        ],
        out_specs=[
            pl.BlockSpec((block_b, H), lambda i: (i, 0)),         # outputs
            pl.BlockSpec((block_b, N, 1), lambda i: (i, 0, 0)),   # weights
        ],
        out_shape=[
            jax.ShapeDtypeStruct((B, H), jnp.float32),
            jax.ShapeDtypeStruct((B, N, 1), jnp.float32),
        ],
        compiler_params=pltpu.CompilerParams(
            dimension_semantics=("parallel",)),   # shards batch tiles on v7x's 2 TCs
    )(x, w1, b1, w2, b2)

    # Dropping the trailing unit dim is a free metadata-only reshape in XLA.
    return outputs, weights3[:, :, 0]


# ---------------------------------------------------------------------------
# Demo / self-check
# ---------------------------------------------------------------------------
if __name__ == "__main__":
    B, N, H = 64, 16, 128          # batch of sequences, positions, hidden (lane-dense)

    key = jax.random.PRNGKey(0)
    kx, k1, k2, k3, k4 = jax.random.split(key, 5)
    x  = jax.random.normal(kx, (B, N, H), jnp.float32)
    w1 = 0.1 * jax.random.normal(k1, (H, 64), jnp.float32)   # Linear(H,64).weight.T
    b1 = 0.1 * jax.random.normal(k2, (1, 64), jnp.float32)
    w2 = 0.1 * jax.random.normal(k3, (1, 64), jnp.float32)   # Linear(64,1).weight row
    b2 = 0.1 * jax.random.normal(k4, (1, 1), jnp.float32)

    fwd = jax.jit(self_attention)
    outputs, weights = fwd(x, w1, b1, w2, b2)
    outputs, weights = jax.block_until_ready((outputs, weights))

    # pure-JAX reference (same math as the torch module)
    e_ref = jnp.maximum(jnp.einsum("bnh,hk->bnk", x, w1) + b1, 0.0)
    energy_ref = jnp.einsum("bnk,k->bn", e_ref, w2[0]) + b2[0, 0]
    w_ref = jax.nn.softmax(energy_ref, axis=1)
    out_ref = jnp.einsum("bnh,bn->bh", x, w_ref)

    assert outputs.shape == (B, H) and weights.shape == (B, N)
    assert bool(jnp.isfinite(outputs).all()) and bool(jnp.isfinite(weights).all())
    assert float(jnp.max(jnp.abs(weights.sum(axis=1) - 1.0))) < 1e-5
    assert float(jnp.max(jnp.abs(weights - w_ref))) < 1e-4
    assert float(jnp.max(jnp.abs(outputs - out_ref))) < 2e-3
    print("KERNEL_OK")
</pallas_src>

<mosaic_0001>
module attributes {stable_mosaic.version = 11 : i64} {
  func.func @_self_attention_kernel(%arg0: i32, %arg1: memref<16x16x128xf32, #tpu.memory_space<vmem>>, %arg2: memref<128x64xf32, #tpu.memory_space<vmem>>, %arg3: memref<1x64xf32, #tpu.memory_space<vmem>>, %arg4: memref<1x64xf32, #tpu.memory_space<vmem>>, %arg5: memref<1x1xf32, #tpu.memory_space<vmem>>, %arg6: memref<16x128xf32, #tpu.memory_space<vmem>>, %arg7: memref<16x16x1xf32, #tpu.memory_space<vmem>>) attributes {dimension_semantics = [#tpu.dimension_semantics<parallel>], iteration_bounds = array<i64: 4>, scalar_prefetch = 0 : i64, scratch_operands = 0 : i64, tpu.core_type = #tpu.core_type<tc>, window_params = [{transform_indices = @transform_0, window_bounds = array<i64: 16, 16, 128>}, {pipeline_mode = #tpu.pipeline_mode<synchronous>, transform_indices = @transform_1, window_bounds = array<i64: 128, 64>}, {pipeline_mode = #tpu.pipeline_mode<synchronous>, transform_indices = @transform_2, window_bounds = array<i64: 1, 64>}, {pipeline_mode = #tpu.pipeline_mode<synchronous>, transform_indices = @transform_3, window_bounds = array<i64: 1, 64>}, {pipeline_mode = #tpu.pipeline_mode<synchronous>, transform_indices = @transform_4, window_bounds = array<i64: 1, 1>}, {transform_indices = @transform_5, window_bounds = array<i64: 16, 128>}, {transform_indices = @transform_6, window_bounds = array<i64: 16, 16, 1>}]} {
    %c0 = arith.constant 0 : index
    %c0_0 = arith.constant 0 : index
    %c0_1 = arith.constant 0 : index
    %0 = vector.load %arg1[%c0, %c0_0, %c0_1] : memref<16x16x128xf32, #tpu.memory_space<vmem>>, vector<16x16x128xf32>
    %1 = vector.shape_cast %0 : vector<16x16x128xf32> to vector<256x128xf32>
    %c0_2 = arith.constant 0 : index
    %c0_3 = arith.constant 0 : index
    %2 = vector.load %arg2[%c0_2, %c0_3] : memref<128x64xf32, #tpu.memory_space<vmem>>, vector<128x64xf32>
    %cst = arith.constant dense<0.000000e+00> : vector<256x64xf32>
    %3 = tpu.matmul %1, %2, %cst {dimension_numbers = #tpu.dot_dimension_numbers<[1], [0], [0], [1], [0, 0, 1, 1], [], []>} : vector<256x128xf32>, vector<128x64xf32>, vector<256x64xf32> -> vector<256x64xf32>
    %c0_4 = arith.constant 0 : index
    %c0_5 = arith.constant 0 : index
    %4 = vector.load %arg3[%c0_4, %c0_5] : memref<1x64xf32, #tpu.memory_space<vmem>>, vector<1x64xf32>
    %5 = vector.broadcast %4 : vector<1x64xf32> to vector<256x64xf32>
    %6 = arith.addf %3, %5 : vector<256x64xf32>
    %cst_6 = arith.constant 0.000000e+00 : f32
    %7 = vector.broadcast %cst_6 : f32 to vector<256x64xf32>
    %8 = arith.maximumf %6, %7 : vector<256x64xf32>
    %9 = vector.shape_cast %8 : vector<256x64xf32> to vector<16x16x64xf32>
    %c0_7 = arith.constant 0 : index
    %c0_8 = arith.constant 0 : index
    %10 = vector.load %arg4[%c0_7, %c0_8] : memref<1x64xf32, #tpu.memory_space<vmem>>, vector<1x64xf32>
    %11 = vector.shape_cast %10 : vector<1x64xf32> to vector<1x1x64xf32>
    %12 = vector.broadcast %11 : vector<1x1x64xf32> to vector<16x16x64xf32>
    %13 = arith.mulf %9, %12 : vector<16x16x64xf32>
    %cst_9 = arith.constant dense<0.000000e+00> : vector<16x16xf32>
    %14 = vector.multi_reduction <add>, %13, %cst_9 [2] : vector<16x16x64xf32> to vector<16x16xf32>
    %15 = vector.shape_cast %14 : vector<16x16xf32> to vector<16x16x1xf32>
    %c0_10 = arith.constant 0 : index
    %c0_11 = arith.constant 0 : index
    %16 = vector.load %arg5[%c0_10, %c0_11] : memref<1x1xf32, #tpu.memory_space<vmem>>, vector<1x1xf32>
    %17 = vector.shape_cast %16 : vector<1x1xf32> to vector<1x1x1xf32>
    %18 = vector.broadcast %17 : vector<1x1x1xf32> to vector<16x16x1xf32>
    %19 = arith.addf %15, %18 : vector<16x16x1xf32>
    %cst_12 = arith.constant dense<0xFF800000> : vector<16x1xf32>
    %20 = vector.multi_reduction <maximumf>, %19, %cst_12 [1] : vector<16x16x1xf32> to vector<16x1xf32>
    %21 = vector.shape_cast %20 : vector<16x1xf32> to vector<16x1x1xf32>
    %22 = vector.broadcast %21 : vector<16x1x1xf32> to vector<16x16x1xf32>
    %23 = arith.subf %19, %22 : vector<16x16x1xf32>
    %24 = math.exp %23 : vector<16x16x1xf32>
    %cst_13 = arith.constant dense<0.000000e+00> : vector<16x1xf32>
    %25 = vector.multi_reduction <add>, %24, %cst_13 [1] : vector<16x16x1xf32> to vector<16x1xf32>
    %26 = vector.shape_cast %25 : vector<16x1xf32> to vector<16x1x1xf32>
    %27 = vector.broadcast %26 : vector<16x1x1xf32> to vector<16x16x1xf32>
    %28 = arith.divf %24, %27 : vector<16x16x1xf32>
    %29 = vector.broadcast %28 : vector<16x16x1xf32> to vector<16x16x128xf32>
    %30 = arith.mulf %0, %29 : vector<16x16x128xf32>
    %cst_14 = arith.constant dense<0.000000e+00> : vector<16x128xf32>
    %31 = vector.multi_reduction <add>, %30, %cst_14 [1] : vector<16x16x128xf32> to vector<16x128xf32>
    %c0_15 = arith.constant 0 : index
    %c0_16 = arith.constant 0 : index
    %32 = vector.load %arg6[%c0_15, %c0_16] : memref<16x128xf32, #tpu.memory_space<vmem>>, vector<16x128xf32>
    tpu.vector_store %arg6[%c0_15, %c0_16], %31 {strides = array<i32>} : memref<16x128xf32, #tpu.memory_space<vmem>>, vector<16x128xf32>,
    %c0_17 = arith.constant 0 : index
    %c0_18 = arith.constant 0 : index
    %c0_19 = arith.constant 0 : index
    %33 = vector.load %arg7[%c0_17, %c0_18, %c0_19] : memref<16x16x1xf32, #tpu.memory_space<vmem>>, vector<16x16x1xf32>
    tpu.vector_store %arg7[%c0_17, %c0_18, %c0_19], %28 {strides = array<i32>} : memref<16x16x1xf32, #tpu.memory_space<vmem>>, vector<16x16x1xf32>,
    return
  }
  func.func @transform_0(%arg0: i32) -> (i32, i32, i32) {
    %c0_i32 = arith.constant 0 : i32
    %c0_i32_0 = arith.constant 0 : i32
    %c0_i32_1 = arith.constant 0 : i32
    return %arg0, %c0_i32, %c0_i32_0 : i32, i32, i32
  }
  func.func @transform_1(%arg0: i32) -> (i32, i32) {
    %c0_i32 = arith.constant 0 : i32
    %c0_i32_0 = arith.constant 0 : i32
    %c0_i32_1 = arith.constant 0 : i32
    return %c0_i32, %c0_i32_0 : i32, i32
  }
  func.func @transform_2(%arg0: i32) -> (i32, i32) {
    %c0_i32 = arith.constant 0 : i32
    %c0_i32_0 = arith.constant 0 : i32
    %c0_i32_1 = arith.constant 0 : i32
    return %c0_i32, %c0_i32_0 : i32, i32
  }
  func.func @transform_3(%arg0: i32) -> (i32, i32) {
    %c0_i32 = arith.constant 0 : i32
    %c0_i32_0 = arith.constant 0 : i32
    %c0_i32_1 = arith.constant 0 : i32
    return %c0_i32, %c0_i32_0 : i32, i32
  }
  func.func @transform_4(%arg0: i32) -> (i32, i32) {
    %c0_i32 = arith.constant 0 : i32
    %c0_i32_0 = arith.constant 0 : i32
    %c0_i32_1 = arith.constant 0 : i32
    return %c0_i32, %c0_i32_0 : i32, i32
  }
  func.func @transform_5(%arg0: i32) -> (i32, i32) {
    %c0_i32 = arith.constant 0 : i32
    %c0_i32_0 = arith.constant 0 : i32
    return %arg0, %c0_i32 : i32, i32
  }
  func.func @transform_6(%arg0: i32) -> (i32, i32, i32) {
    %c0_i32 = arith.constant 0 : i32
    %c0_i32_0 = arith.constant 0 : i32
    %c0_i32_1 = arith.constant 0 : i32
    return %arg0, %c0_i32, %c0_i32_0 : i32, i32, i32
  }
}

</mosaic_0001>

<llo_original>
// kernel: self_attention.1
$region0: #{self_attention.1}
  #allocation0 [shape = 'u32[]', space=smem, size = 0x4, offset = 0x4, fixed_abs, tag = 'smem constant byte address 0x4 - core index']
  #allocation1 [shape = 'u32[144,128]{1,0:T(1,128)}', space=vmem, size = 0x12000, scoped, tag = 'internal scratch']
  #allocation2 [shape = 'f32[1,1]{1,0:T(1,128)S(1)}', space=vmem, size = 0x200, scoped, tag = 'scoped memory for self_attention.1']
  %s0 = inlined_call_operand.hbm [shape: f32[64,16,128], index: 0, kind: input, shape index: {}]
  %s1 = inlined_call_operand.vmem [shape: f32[128,64], index: 1, kind: input, shape index: {}]
  %s2 = inlined_call_operand.vmem [shape: f32[1,64], index: 2, kind: input, shape index: {}]
  %s3 = inlined_call_operand.vmem [shape: f32[1,64], index: 3, kind: input, shape index: {}]
  %s4 = inlined_call_operand.<no memory space> [shape: f32[1,1], index: 4, kind: input, shape index: {}]
  %s5 = inlined_call_operand.hbm [shape: f32[64,128], index: 5, kind: output, shape index: {0}]
  %s6 = inlined_call_operand.vmem [shape: f32[64,16,1], index: 6, kind: output, shape index: {1}]
  %7 = xla_tuple %s5, %s6
  %s8 = sld [smem:[#allocation0]]
  $region65: #{self_attention.1} parent=0
    _
  %s10 = ssub.s32 1, %s8
  %s11 = scalar_select 0, %s10, %s8
  %v12 = vstv %s4
  %13 = vst [vmem:[#allocation2] sm:$0x1] %v12
  $region1: #{self_attention.1} parent=0
    #allocation3 [shape = 'u8[262144]{0}', space=vmem, size = 0x40000, scoped, tag = 'input window, operand 0']
    #allocation4 [shape = 's32[2]{0}', space=sflag, size = 0x8, scoped, tag = 'scoped memory for self_attention.1']
    #allocation5 [shape = 's32[2]{0}', space=sflag, size = 0x8, scoped, tag = 'scoped memory for self_attention.1']
    #allocation6 [shape = 'u8[16384]{0}', space=vmem, size = 0x4000, scoped, tag = 'output window, operand 0']
    %14 = vsyncpa [#allocation4], 0
    %s15 = scalar_lea.sflag [#allocation4], 1
    %16 = vsyncpa %s15, 0
    %17 = vsyncpa [#allocation5], 0
    %s18 = scalar_lea.sflag [#allocation5], 1
    %19 = vsyncpa %s18, 0
    loop: start=0, step=1, limit=6
    $region2: #{self_attention.1} parent=1 // loop_pre_header
      _
    $region3: #{self_attention.1} parent=1 // loop_header
      %s21 = sphi 0, %s25
      %p22 = scmp.ge.s32.totalorder %s21, 6
      %s31 = sphi 0, %s33
      %s34 = sphi 0, %s31
      %s35 = sphi 0, %s34
      %s51 = sphi 0, %s35
      %s55 = sphi 0, %s55
      %s57 = sphi 0, %s55
      %s58 = sphi 0, %s57
      %s72 = sphi 0, %s58
      %s76 = sphi 0, %s76
      %s78 = sphi 0, %s76
      %s79 = sphi 0, %s78
      %s93 = sphi 0, %s79
      %s97 = sphi 0, %s97
      %s99 = sphi 0, %s97
      %s100 = sphi 0, %s99
      %s114 = sphi 0, %s100
      %s118 = sphi 0, %s118
      %s120 = sphi 0, %s118
      %s121 = sphi 0, %s120
      %s135 = sphi 0, %s121
      %s141 = sphi 0, %s143
      %s144 = sphi 0, %s141
      %s145 = sphi 0, %s144
      %s161 = sphi 0, %s145
      %s167 = sphi 0, %s169
      %s170 = sphi 0, %s167
      %s171 = sphi 0, %s170
      %s187 = sphi 0, %s171
    $region4: #{self_attention.1} parent=1 // loop_header_branch
      %24 = sbr.rel (%p22) target = $region8
    $region5: #{self_attention.1} parent=1 // loop_body
      %s26 = ssub.s32 %s21, 1
      %s27 = ssub.s32 %s21, 2
      %s28 = sadd.s32 %s21, 1
      %s29 = ssub.s32 %s21, %s28
      %p30 = scmp.eq.s32.totalorder %s29, 0
      %s32 = sadd.s32 %s31, 1
      %s33 = scalar_select %p30, %s31, %s32
      %p36 = pneg %p30
      %p37 = scmp.eq.s32.totalorder %s21, 3
      %p38 = por %p36, %p37
      %p39 = scmp.ne.s32.totalorder %s31, %s34
      %p40 = scmp.eq.s32.totalorder %s21, 0
      %p41 = por %p39, %p40
      %p42 = scmp.ne.s32.totalorder %s31, %s34
      %p43 = scmp.eq.s32.totalorder %s26, 3
      %p44 = por %p42, %p43
      %p45 = scmp.ne.s32.totalorder %s34, %s35
      %p46 = scmp.eq.s32.totalorder %s26, 0
      %p47 = por %p45, %p46
      %p48 = scmp.ne.s32.totalorder %s34, %s35
      %p49 = scmp.eq.s32.totalorder %s27, 3
      %p50 = por %p48, %p49
      %p52 = scmp.ne.s32.totalorder %s35, %s51
      %p53 = scmp.eq.s32.totalorder %s27, 0
      %p54 = por %p52, %p53
      %s56 = sadd.s32 %s55, 1
      %p59 = scmp.eq.s32.totalorder %s21, 3
      %p60 = scmp.ne.s32.totalorder %s55, %s57
      %p61 = scmp.eq.s32.totalorder %s21, 0
      %p62 = por %p60, %p61
      %p63 = scmp.ne.s32.totalorder %s55, %s57
      %p64 = scmp.eq.s32.totalorder %s26, 3
      %p65 = por %p63, %p64
      %p66 = scmp.ne.s32.totalorder %s57, %s58
      %p67 = scmp.eq.s32.totalorder %s26, 0
      %p68 = por %p66, %p67
      %p69 = scmp.ne.s32.totalorder %s57, %s58
      %p70 = scmp.eq.s32.totalorder %s27, 3
      %p71 = por %p69, %p70
      %p73 = scmp.ne.s32.totalorder %s58, %s72
      %p74 = scmp.eq.s32.totalorder %s27, 0
      %p75 = por %p73, %p74
      %s77 = sadd.s32 %s76, 1
      %p80 = scmp.eq.s32.totalorder %s21, 3
      %p81 = scmp.ne.s32.totalorder %s76, %s78
      %p82 = scmp.eq.s32.totalorder %s21, 0
      %p83 = por %p81, %p82
      %p84 = scmp.ne.s32.totalorder %s76, %s78
      %p85 = scmp.eq.s32.totalorder %s26, 3
      %p86 = por %p84, %p85
      %p87 = scmp.ne.s32.totalorder %s78, %s79
      %p88 = scmp.eq.s32.totalorder %s26, 0
      %p89 = por %p87, %p88
      %p90 = scmp.ne.s32.totalorder %s78, %s79
      %p91 = scmp.eq.s32.totalorder %s27, 3
      %p92 = por %p90, %p91
      %p94 = scmp.ne.s32.totalorder %s79, %s93
      %p95 = scmp.eq.s32.totalorder %s27, 0
      %p96 = por %p94, %p95
      %s98 = sadd.s32 %s97, 1
      %p101 = scmp.eq.s32.totalorder %s21, 3
      %p102 = scmp.ne.s32.totalorder %s97, %s99
      %p103 = scmp.eq.s32.totalorder %s21, 0
      %p104 = por %p102, %p103
      %p105 = scmp.ne.s32.totalorder %s97, %s99
      %p106 = scmp.eq.s32.totalorder %s26, 3
      %p107 = por %p105, %p106
      %p108 = scmp.ne.s32.totalorder %s99, %s100
      %p109 = scmp.eq.s32.totalorder %s26, 0
      %p110 = por %p108, %p109
      %p111 = scmp.ne.s32.totalorder %s99, %s100
      %p112 = scmp.eq.s32.totalorder %s27, 3
      %p113 = por %p111, %p112
      %p115 = scmp.ne.s32.totalorder %s100, %s114
      %p116 = scmp.eq.s32.totalorder %s27, 0
      %p117 = por %p115, %p116
      %s119 = sadd.s32 %s118, 1
      %p122 = scmp.eq.s32.totalorder %s21, 3
      %p123 = scmp.ne.s32.totalorder %s118, %s120
      %p124 = scmp.eq.s32.totalorder %s21, 0
      %p125 = por %p123, %p124
      %p126 = scmp.ne.s32.totalorder %s118, %s120
      %p127 = scmp.eq.s32.totalorder %s26, 3
      %p128 = por %p126, %p127
      %p129 = scmp.ne.s32.totalorder %s120, %s121
      %p130 = scmp.eq.s32.totalorder %s26, 0
      %p131 = por %p129, %p130
      %p132 = scmp.ne.s32.totalorder %s120, %s121
      %p133 = scmp.eq.s32.totalorder %s27, 3
      %p134 = por %p132, %p133
      %p136 = scmp.ne.s32.totalorder %s121, %s135
      %p137 = scmp.eq.s32.totalorder %s27, 0
      %p138 = por %p136, %p137
      %s139 = ssub.s32 %s21, %s28
      %p140 = scmp.eq.s32.totalorder %s139, 0
      %s142 = sadd.s32 %s141, 1
      %s143 = scalar_select %p140, %s141, %s142
      %p146 = pneg %p140
      %p147 = scmp.eq.s32.totalorder %s21, 3
      %p148 = por %p146, %p147
      %p149 = scmp.ne.s32.totalorder %s141, %s144
      %p150 = scmp.eq.s32.totalorder %s21, 0
      %p151 = por %p149, %p150
      %p152 = scmp.ne.s32.totalorder %s141, %s144
      %p153 = scmp.eq.s32.totalorder %s26, 3
      %p154 = por %p152, %p153
      %p155 = scmp.ne.s32.totalorder %s144, %s145
      %p156 = scmp.eq.s32.totalorder %s26, 0
      %p157 = por %p155, %p156
      %p158 = scmp.ne.s32.totalorder %s144, %s145
      %p159 = scmp.eq.s32.totalorder %s27, 3
      %p160 = por %p158, %p159
      %p162 = scmp.ne.s32.totalorder %s145, %s161
      %p163 = scmp.eq.s32.totalorder %s27, 0
      %p164 = por %p162, %p163
      %s165 = ssub.s32 %s21, %s28
      %p166 = scmp.eq.s32.totalorder %s165, 0
      %s168 = sadd.s32 %s167, 1
      %s169 = scalar_select %p166, %s167, %s168
      %p172 = pneg %p166
      %p173 = scmp.eq.s32.totalorder %s21, 3
      %p174 = por %p172, %p173
      %p175 = scmp.ne.s32.totalorder %s167, %s170
      %p176 = scmp.eq.s32.totalorder %s21, 0
      %p177 = por %p175, %p176
      %p178 = scmp.ne.s32.totalorder %s167, %s170
      %p179 = scmp.eq.s32.totalorder %s26, 3
      %p180 = por %p178, %p179
      %p181 = scmp.ne.s32.totalorder %s170, %s171
      %p182 = scmp.eq.s32.totalorder %s26, 0
      %p183 = por %p181, %p182
      %p184 = scmp.ne.s32.totalorder %s170, %s171
      %p185 = scmp.eq.s32.totalorder %s27, 3
      %p186 = por %p184, %p185
      %p188 = scmp.ne.s32.totalorder %s171, %s187
      %p189 = scmp.eq.s32.totalorder %s27, 0
      %p190 = por %p188, %p189
      %p191 = scmp.le.s32.totalorder 1, %s21
      %p192 = scmp.lt.s32.totalorder %s21, 5
      %p193 = pnand %p191, %p192
      %p194 = pneg %p193
      // Predicated region
      $region9: #{self_attention.1} parent=5 // pred_check
        _
      $region10: #{self_attention.1} parent=5 // pred_check_branch
        %196 = sbr.rel (%p193) target = $region12
      $region11: #{self_attention.1} parent=5 // pred_region
        %s197 = ssub.s32 %s21, 1
        // Predicated region
        $region13: #{self_attention.1} parent=11 // pred_check
          %p198 = pneg %p68
        $region14: #{self_attention.1} parent=11 // pred_check_branch
          %200 = sbr.rel (%p198) target = $region16
        $region15: #{self_attention.1} parent=11 // pred_region
          _
        $region16: #{self_attention.1} parent=11 // pred_fallthru
          _
        // Predicated region
        $region17: #{self_attention.1} parent=11 // pred_check
          %p201 = pneg %p89
        $region18: #{self_attention.1} parent=11 // pred_check_branch
          %203 = sbr.rel (%p201) target = $region20
        $region19: #{self_attention.1} parent=11 // pred_region
          _
        $region20: #{self_attention.1} parent=11 // pred_fallthru
          _
        // Predicated region
        $region21: #{self_attention.1} parent=11 // pred_check
          %p204 = pneg %p110
        $region22: #{self_attention.1} parent=11 // pred_check_branch
          %206 = sbr.rel (%p204) target = $region24
        $region23: #{self_attention.1} parent=11 // pred_region
          _
        $region24: #{self_attention.1} parent=11 // pred_fallthru
          _
        // Predicated region
        $region25: #{self_attention.1} parent=11 // pred_check
          %p207 = pneg %p131
        $region26: #{self_attention.1} parent=11 // pred_check_branch
          %209 = sbr.rel (%p207) target = $region28
        $region27: #{self_attention.1} parent=11 // pred_region
          _
        $region28: #{self_attention.1} parent=11 // pred_fallthru
          _
      $region12: #{self_attention.1} parent=5 // pred_fallthru
        _
      %p210 = scmp.lt.s32.totalorder %s21, 4
      // Predicated region
      $region29: #{self_attention.1} parent=5 // pred_check
        %p211 = pneg %p210
      $region30: #{self_attention.1} parent=5 // pred_check_branch
        %213 = sbr.rel (%p211) target = $region32
      $region31: #{self_attention.1} parent=5 // pred_region
        // Predicated region
        $region33: #{self_attention.1} parent=31 // pred_check
          %p214 = pneg %p41
        $region34: #{self_attention.1} parent=31 // pred_check_branch
          %216 = sbr.rel (%p214) target = $region36
        $region35: #{self_attention.1} parent=31 // pred_region
          %s217 = sand.u32 %s31, 1
          %s218 = scalar_lea.sflag [#allocation4], %s217
          %s219 = sand.u32 %s31, 1
          %s220 = smul.addr %s219, 256
          %s221 = scalar_lea.vmem [#allocation3], %s220
          %s222 = smul.u32 16, %s21
          %s224 = ssub.s32 4096, 4096
          %225 = vsyncadd %s218, %s224
          %s226 = smul.addr %s222, 2
          %s227 = smul.addr %s226, 128
          %s228 = scalar_lea.hbm %s0, %s227
          %s229 = sshll.u32 %s221, 4
          %s230 = int_to_ptr.vmem [resolvable:$true] %s229
          %235 = dma.hbm_to_vmem [thread:$0]  %s228, 4096, %s230, %s218, 128, 128, 8
        $region36: #{self_attention.1} parent=31 // pred_fallthru
          _
      $region32: #{self_attention.1} parent=5 // pred_fallthru
        _
      %p236 = scmp.le.s32.totalorder 1, %s21
      %p237 = scmp.lt.s32.totalorder %s21, 5
      %p238 = pnand %p236, %p237
      %p239 = pneg %p238
      // Predicated region
      $region37: #{self_attention.1} parent=5 // pred_check
        _
      $region38: #{self_attention.1} parent=5 // pred_check_branch
        %241 = sbr.rel (%p238) target = $region40
      $region39: #{self_attention.1} parent=5 // pred_region
        %s242 = ssub.s32 %s21, 1
        %s243 = sand.u32 %s34, 1
        %s244 = scalar_lea.sflag [#allocation4], %s243
        %s245 = sand.u32 %s34, 1
        %s246 = smul.addr %s245, 256
        %s247 = scalar_lea.vmem [#allocation3], %s246
        // Predicated region
        $region41: #{self_attention.1} parent=39 // pred_check
          %p248 = pneg %p47
        $region42: #{self_attention.1} parent=39 // pred_check_branch
          %250 = sbr.rel (%p248) target = $region44
        $region43: #{self_attention.1} parent=39 // pred_region
          %251 = dma.done %s244, 4096
        $region44: #{self_attention.1} parent=39 // pred_fallthru
          _
        %s252 = sand.u32 %s34, 1
        %s253 = scalar_lea.sflag [#allocation4], %s252
        %s254 = sand.u32 %s34, 1
        %s255 = smul.addr %s254, 256
        %s256 = scalar_lea.vmem [#allocation3], %s255
        %p257 = pneg %p47
        %p258 = pneg %p44
        %p259 = pneg %p68
        %p260 = pneg %p65
        %p261 = pneg %p89
        %p262 = pneg %p86
        %p263 = pneg %p110
        %p264 = pneg %p107
        %p265 = pneg %p131
        %p266 = pneg %p128
        %p267 = pneg %p157
        %p268 = pneg %p154
        %s269 = sand.u32 %s144, 1
        %s270 = scalar_lea.sflag [#allocation5], %s269
        %s271 = sand.u32 %s144, 1
        %s272 = smul.addr %s271, 16
        %s273 = scalar_lea.vmem [#allocation6], %s272
        %p274 = pneg %p183
        %p275 = pneg %p180
        %s276 = smul.u32 16, %s26
        %p277 = scmp.lt.s32.totalorder %s276, 63
        %s278 = scalar_select %p277, %s276, 63
        %s279 = smul.addr %s278, 2
        %s280 = smul.addr %s279, 8
        %s281 = scalar_lea.vmem %s6, %s280
        %s282 = smul.u32 16, %s26
        %s283 = smul.u32 2, %s26
        %s284 = smul.u32 16, %s26
        %p285 = scmp.lt.s32.totalorder %s284, 63
        %s286 = scalar_select %p285, %s284, 63
        %s287 = smul.addr %s286, 2
        %s288 = smul.addr %s287, 8
        %s289 = scalar_lea.vmem %s6, %s288
        %s290 = smul.u32 16, %s26
        %v291 = vld [vmem:[%s247] sm:$0xff]
        %v292 = vld [vmem:[%s247 + $0x8] sm:$0xff]
        %v293 = vld [vmem:[%s247 + $0x10] sm:$0xff]
        %v294 = vld [vmem:[%s247 + $0x18] sm:$0xff]
        %v295 = vld [vmem:[%s247 + $0x20] sm:$0xff]
        %v296 = vld [vmem:[%s247 + $0x28] sm:$0xff]
        %v297 = vld [vmem:[%s247 + $0x30] sm:$0xff]
        %v298 = vld [vmem:[%s247 + $0x38] sm:$0xff]
        %v299 = vld [vmem:[%s247 + $0x40] sm:$0xff]
        %v300 = vld [vmem:[%s247 + $0x48] sm:$0xff]
        %v301 = vld [vmem:[%s247 + $0x50] sm:$0xff]
        %v302 = vld [vmem:[%s247 + $0x58] sm:$0xff]
        %v303 = vld [vmem:[%s247 + $0x60] sm:$0xff]
        %v304 = vld [vmem:[%s247 + $0x68] sm:$0xff]
        %v305 = vld [vmem:[%s247 + $0x70] sm:$0xff]
        %v306 = vld [vmem:[%s247 + $0x78] sm:$0xff]
        %v307 = vld [vmem:[%s247 + $0x80] sm:$0xff]
        %v308 = vld [vmem:[%s247 + $0x88] sm:$0xff]
        %v309 = vld [vmem:[%s247 + $0x90] sm:$0xff]
        %v310 = vld [vmem:[%s247 + $0x98] sm:$0xff]
        %v311 = vld [vmem:[%s247 + $0xa0] sm:$0xff]
        %v312 = vld [vmem:[%s247 + $0xa8] sm:$0xff]
        %v313 = vld [vmem:[%s247 + $0xb0] sm:$0xff]
        %v314 = vld [vmem:[%s247 + $0xb8] sm:$0xff]
        %v315 = vld [vmem:[%s247 + $0xc0] sm:$0xff]
        %v316 = vld [vmem:[%s247 + $0xc8] sm:$0xff]
        %v317 = vld [vmem:[%s247 + $0xd0] sm:$0xff]
        %v318 = vld [vmem:[%s247 + $0xd8] sm:$0xff]
        %v319 = vld [vmem:[%s247 + $0xe0] sm:$0xff]
        %v320 = vld [vmem:[%s247 + $0xe8] sm:$0xff]
        %v321 = vld [vmem:[%s247 + $0xf0] sm:$0xff]
        %v322 = vld [vmem:[%s247 + $0xf8] sm:$0xff]
        %v323 = vld [vmem:[%s1] sm:$0xff]
        %v324 = vld [vmem:[%s1 + $0x8] sm:$0xff]
        %v325 = vld [vmem:[%s1 + $0x10] sm:$0xff]
        %v326 = vld [vmem:[%s1 + $0x18] sm:$0xff]
        %v327 = vld [vmem:[%s1 + $0x20] sm:$0xff]
        %v328 = vld [vmem:[%s1 + $0x28] sm:$0xff]
        %v329 = vld [vmem:[%s1 + $0x30] sm:$0xff]
        %v330 = vld [vmem:[%s1 + $0x38] sm:$0xff]
        %v331 = vld [vmem:[%s1 + $0x40] sm:$0xff]
        %v332 = vld [vmem:[%s1 + $0x48] sm:$0xff]
        %v333 = vld [vmem:[%s1 + $0x50] sm:$0xff]
        %v334 = vld [vmem:[%s1 + $0x58] sm:$0xff]
        %v335 = vld [vmem:[%s1 + $0x60] sm:$0xff]
        %v336 = vld [vmem:[%s1 + $0x68] sm:$0xff]
        %v337 = vld [vmem:[%s1 + $0x70] sm:$0xff]
        %v338 = vld [vmem:[%s1 + $0x78] sm:$0xff]
        %v339 = vld [vmem:[%s2] sm:$0x1]
        %v341 = vlaneseq
        %v342 = vshrl.u32 %v341, 7
        %v343 = vsub.s32 0, %v342
        %v344 = vrot.slane %v339, %v343
        %346 = vmatprep.subr.mxu0 0.0
        %347 = vmatpush1.msra.mxu0 %v323
        %348 = vmatprep.subr.mxu0 0.0
        %349 = vmatpush1.msra.mxu0 %v324
        %350 = vmatprep.subr.mxu0 0.0
        %351 = vmatpush1.msra.mxu0 %v325
        %352 = vmatprep.subr.mxu0 0.0
        %353 = vmatpush1.msra.mxu0 %v326
        %354 = vmatprep.subr.mxu0 0.0
        %355 = vmatpush1.msra.mxu0 %v327
        %356 = vmatprep.subr.mxu0 0.0
        %357 = vmatpush1.msra.mxu0 %v328
        %358 = vmatprep.subr.mxu0 0.0
        %359 = vmatpush1.msra.mxu0 %v329
        %360 = vmatprep.subr.mxu0 0.0
        %361 = vmatpush1.msra.mxu0 %v330
        %362 = vmatprep.subr.mxu0 0.0
        %363 = vmatpush1.msra.mxu0 %v331
        %364 = vmatprep.subr.mxu0 0.0
        %365 = vmatpush1.msra.mxu0 %v332
        %366 = vmatprep.subr.mxu0 0.0
        %367 = vmatpush1.msra.mxu0 %v333
        %368 = vmatprep.subr.mxu0 0.0
        %369 = vmatpush1.msra.mxu0 %v334
        %370 = vmatprep.subr.mxu0 0.0
        %371 = vmatpush1.msra.mxu0 %v335
        %372 = vmatprep.subr.mxu0 0.0
        %373 = vmatpush1.msra.mxu0 %v336
        %374 = vmatprep.subr.mxu0 0.0
        %375 = vmatpush1.msra.mxu0 %v337
        %376 = vmatprep.subr.mxu0 0.0
        %377 = vmatpush1.msra.mxu0 %v338
        %378 = vmatprep.subr.mxu0 0.0
        %379 = vmatpush1.msra.mxu0 0.0
        %380 = vmatprep.subr.mxu0 0.0
        %381 = vmatpush1.msra.mxu0 0.0
        %382 = vmatprep.subr.mxu0 0.0
        %383 = vmatpush1.msra.mxu0 0.0
        %384 = vmatprep.subr.mxu0 0.0
        %385 = vmatpush1.msra.mxu0 0.0
        %386 = vmatprep.subr.mxu0 0.0
        %387 = vmatpush1.msra.mxu0 0.0
        %388 = vmatprep.subr.mxu0 0.0
        %389 = vmatpush1.msra.mxu0 0.0
        %390 = vmatprep.subr.mxu0 0.0
        %391 = vmatpush1.msra.mxu0 0.0
        %392 = vmatprep.subr.mxu0 0.0
        %393 = vmatpush1.msra.mxu0 0.0
        %394 = vmatprep.subr.mxu0 0.0
        %395 = vmatpush1.msra.mxu0 0.0
        %396 = vmatprep.subr.mxu0 0.0
        %397 = vmatpush1.msra.mxu0 0.0
        %398 = vmatprep.subr.mxu0 0.0
        %399 = vmatpush1.msra.mxu0 0.0
        %400 = vmatprep.subr.mxu0 0.0
        %401 = vmatpush1.msra.mxu0 0.0
        %402 = vmatprep.subr.mxu0 0.0
        %403 = vmatpush1.msra.mxu0 0.0
        %404 = vmatprep.subr.mxu0 0.0
        %405 = vmatpush1.msra.mxu0 0.0
        %406 = vmatprep.subr.mxu0 0.0
        %407 = vmatpush1.msra.mxu0 0.0
        %408 = vmatprep.subr.mxu0 0.0
        %409 = vmatpush1.msra.mxu0 0.0
        %410 = vmatprep.mubr.f32.mxu0 0.0
        %411 = vmatmul.mubr.f32.gmra.mrb[0].mxu0 %v291
        %v412 = vpop.f32.mrb[0].mxu0
        %v413 = vadd.f32 %v344, %v412
        %v414 = vpop.f32.mrb[0].mxu0
        %415 = vmatprep.mubr.f32.mxu0 0.0
        %416 = vmatmul.mubr.f32.gmra.mrb[0].mxu0 %v292
        %v417 = vpop.f32.mrb[0].mxu0
        %v418 = vadd.f32 %v344, %v417
        %v419 = vpop.f32.mrb[0].mxu0
        %420 = vmatprep.mubr.f32.mxu0 0.0
        %421 = vmatmul.mubr.f32.gmra.mrb[0].mxu0 %v293
        %v422 = vpop.f32.mrb[0].mxu0
        %v423 = vadd.f32 %v344, %v422
        %v424 = vpop.f32.mrb[0].mxu0
        %425 = vmatprep.mubr.f32.mxu0 0.0
        %426 = vmatmul.mubr.f32.gmra.mrb[0].mxu0 %v294
        %v427 = vpop.f32.mrb[0].mxu0
        %v428 = vadd.f32 %v344, %v427
        %v429 = vpop.f32.mrb[0].mxu0
        %430 = vmatprep.mubr.f32.mxu0 0.0
        %431 = vmatmul.mubr.f32.gmra.mrb[0].mxu0 %v295
        %v432 = vpop.f32.mrb[0].mxu0
        %v433 = vadd.f32 %v344, %v432
        %v434 = vpop.f32.mrb[0].mxu0
        %435 = vmatprep.mubr.f32.mxu0 0.0
        %436 = vmatmul.mubr.f32.gmra.mrb[0].mxu0 %v296
        %v437 = vpop.f32.mrb[0].mxu0
        %v438 = vadd.f32 %v344, %v437
        %v439 = vpop.f32.mrb[0].mxu0
        %440 = vmatprep.mubr.f32.mxu0 0.0
        %441 = vmatmul.mubr.f32.gmra.mrb[0].mxu0 %v297
        %v442 = vpop.f32.mrb[0].mxu0
        %v443 = vadd.f32 %v344, %v442
        %v444 = vpop.f32.mrb[0].mxu0
        %445 = vmatprep.mubr.f32.mxu0 0.0
        %446 = vmatmul.mubr.f32.gmra.mrb[0].mxu0 %v298
        %v447 = vpop.f32.mrb[0].mxu0
        %v448 = vadd.f32 %v344, %v447
        %v449 = vpop.f32.mrb[0].mxu0
        %450 = vmatprep.mubr.f32.mxu0 0.0
        %451 = vmatmul.mubr.f32.gmra.mrb[0].mxu0 %v299
        %v452 = vpop.f32.mrb[0].mxu0
        %v453 = vadd.f32 %v344, %v452
        %v454 = vpop.f32.mrb[0].mxu0
        %455 = vmatprep.mubr.f32.mxu0 0.0
        %456 = vmatmul.mubr.f32.gmra.mrb[0].mxu0 %v300
        %v457 = vpop.f32.mrb[0].mxu0
        %v458 = vadd.f32 %v344, %v457
        %v459 = vpop.f32.mrb[0].mxu0
        %460 = vmatprep.mubr.f32.mxu0 0.0
        %461 = vmatmul.mubr.f32.gmra.mrb[0].mxu0 %v301
        %v462 = vpop.f32.mrb[0].mxu0
        %v463 = vadd.f32 %v344, %v462
        %v464 = vpop.f32.mrb[0].mxu0
        %465 = vmatprep.mubr.f32.mxu0 0.0
        %466 = vmatmul.mubr.f32.gmra.mrb[0].mxu0 %v302
        %v467 = vpop.f32.mrb[0].mxu0
        %v468 = vadd.f32 %v344, %v467
        %v469 = vpop.f32.mrb[0].mxu0
        %470 = vmatprep.mubr.f32.mxu0 0.0
        %471 = vmatmul.mubr.f32.gmra.mrb[0].mxu0 %v303
        %v472 = vpop.f32.mrb[0].mxu0
        %v473 = vadd.f32 %v344, %v472
        %v474 = vpop.f32.mrb[0].mxu0
        %475 = vmatprep.mubr.f32.mxu0 0.0
        %476 = vmatmul.mubr.f32.gmra.mrb[0].mxu0 %v304
        %v477 = vpop.f32.mrb[0].mxu0
        %v478 = vadd.f32 %v344, %v477
        %v479 = vpop.f32.mrb[0].mxu0
        %480 = vmatprep.mubr.f32.mxu0 0.0
        %481 = vmatmul.mubr.f32.gmra.mrb[0].mxu0 %v305
        %v482 = vpop.f32.mrb[0].mxu0
        %v483 = vadd.f32 %v344, %v482
        %v484 = vpop.f32.mrb[0].mxu0
        %485 = vmatprep.mubr.f32.mxu0 0.0
        %486 = vmatmul.mubr.f32.gmra.mrb[0].mxu0 %v306
        %v487 = vpop.f32.mrb[0].mxu0
        %v488 = vadd.f32 %v344, %v487
        %v489 = vpop.f32.mrb[0].mxu0
        %490 = vmatprep.mubr.f32.mxu0 0.0
        %491 = vmatmul.mubr.f32.gmra.mrb[0].mxu0 %v307
        %v492 = vpop.f32.mrb[0].mxu0
        %v493 = vadd.f32 %v344, %v492
        %v494 = vpop.f32.mrb[0].mxu0
        %495 = vmatprep.mubr.f32.mxu0 0.0
        %496 = vmatmul.mubr.f32.gmra.mrb[0].mxu0 %v308
        %v497 = vpop.f32.mrb[0].mxu0
        %v498 = vadd.f32 %v344, %v497
        %v499 = vpop.f32.mrb[0].mxu0
        %500 = vmatprep.mubr.f32.mxu0 0.0
        %501 = vmatmul.mubr.f32.gmra.mrb[0].mxu0 %v309
        %v502 = vpop.f32.mrb[0].mxu0
        %v503 = vadd.f32 %v344, %v502
        %v504 = vpop.f32.mrb[0].mxu0
        %505 = vmatprep.mubr.f32.mxu0 0.0
        %506 = vmatmul.mubr.f32.gmra.mrb[0].mxu0 %v310
        %v507 = vpop.f32.mrb[0].mxu0
        %v508 = vadd.f32 %v344, %v507
        %v509 = vpop.f32.mrb[0].mxu0
        %510 = vmatprep.mubr.f32.mxu0 0.0
        %511 = vmatmul.mubr.f32.gmra.mrb[0].mxu0 %v311
        %v512 = vpop.f32.mrb[0].mxu0
        %v513 = vadd.f32 %v344, %v512
        %v514 = vpop.f32.mrb[0].mxu0
        %515 = vmatprep.mubr.f32.mxu0 0.0
        %516 = vmatmul.mubr.f32.gmra.mrb[0].mxu0 %v312
        %v517 = vpop.f32.mrb[0].mxu0
        %v518 = vadd.f32 %v344, %v517
        %v519 = vpop.f32.mrb[0].mxu0
        %520 = vmatprep.mubr.f32.mxu0 0.0
        %521 = vmatmul.mubr.f32.gmra.mrb[0].mxu0 %v313
        %v522 = vpop.f32.mrb[0].mxu0
        %v523 = vadd.f32 %v344, %v522
        %v524 = vpop.f32.mrb[0].mxu0
        %525 = vmatprep.mubr.f32.mxu0 0.0
        %526 = vmatmul.mubr.f32.gmra.mrb[0].mxu0 %v314
        %v527 = vpop.f32.mrb[0].mxu0
        %v528 = vadd.f32 %v344, %v527
        %v529 = vpop.f32.mrb[0].mxu0
        %530 = vmatprep.mubr.f32.mxu0 0.0
        %531 = vmatmul.mubr.f32.gmra.mrb[0].mxu0 %v315
        %v532 = vpop.f32.mrb[0].mxu0
        %v533 = vadd.f32 %v344, %v532
        %v534 = vpop.f32.mrb[0].mxu0
        %535 = vmatprep.mubr.f32.mxu0 0.0
        %536 = vmatmul.mubr.f32.gmra.mrb[0].mxu0 %v316
        %v537 = vpop.f32.mrb[0].mxu0
        %v538 = vadd.f32 %v344, %v537
        %v539 = vpop.f32.mrb[0].mxu0
        %540 = vmatprep.mubr.f32.mxu0 0.0
        %541 = vmatmul.mubr.f32.gmra.mrb[0].mxu0 %v317
        %v542 = vpop.f32.mrb[0].mxu0
        %v543 = vadd.f32 %v344, %v542
        %v544 = vpop.f32.mrb[0].mxu0
        %545 = vmatprep.mubr.f32.mxu0 0.0
        %546 = vmatmul.mubr.f32.gmra.mrb[0].mxu0 %v318
        %v547 = vpop.f32.mrb[0].mxu0
        %v548 = vadd.f32 %v344, %v547
        %v549 = vpop.f32.mrb[0].mxu0
        %550 = vmatprep.mubr.f32.mxu0 0.0
        %551 = vmatmul.mubr.f32.gmra.mrb[0].mxu0 %v319
        %v552 = vpop.f32.mrb[0].mxu0
        %v553 = vadd.f32 %v344, %v552
        %v554 = vpop.f32.mrb[0].mxu0
        %555 = vmatprep.mubr.f32.mxu0 0.0
        %556 = vmatmul.mubr.f32.gmra.mrb[0].mxu0 %v320
        %v557 = vpop.f32.mrb[0].mxu0
        %v558 = vadd.f32 %v344, %v557
        %v559 = vpop.f32.mrb[0].mxu0
        %560 = vmatprep.mubr.f32.mxu0 0.0
        %561 = vmatmul.mubr.f32.gmra.mrb[0].mxu0 %v321
        %v562 = vpop.f32.mrb[0].mxu0
        %v563 = vadd.f32 %v344, %v562
        %v564 = vpop.f32.mrb[0].mxu0
        %565 = vmatprep.mubr.f32.mxu0 0.0
        %566 = vmatmul.mubr.f32.gmra.mrb[0].mxu0 %v322
        %v567 = vpop.f32.mrb[0].mxu0
        %v568 = vadd.f32 %v344, %v567
        %v569 = vpop.f32.mrb[0].mxu0
        %570 = vdwg.mxu0
        %v571 = vmax.f32 %v413, 0.0
        %v572 = vmax.f32 %v418, 0.0
        %v573 = vmax.f32 %v423, 0.0
        %v574 = vmax.f32 %v428, 0.0
        %v575 = vmax.f32 %v433, 0.0
        %v576 = vmax.f32 %v438, 0.0
        %v577 = vmax.f32 %v443, 0.0
        %v578 = vmax.f32 %v448, 0.0
        %v579 = vmax.f32 %v453, 0.0
        %v580 = vmax.f32 %v458, 0.0
        %v581 = vmax.f32 %v463, 0.0
        %v582 = vmax.f32 %v468, 0.0
        %v583 = vmax.f32 %v473, 0.0
        %v584 = vmax.f32 %v478, 0.0
        %v585 = vmax.f32 %v483, 0.0
        %v586 = vmax.f32 %v488, 0.0
        %v587 = vmax.f32 %v493, 0.0
        %v588 = vmax.f32 %v498, 0.0
        %v589 = vmax.f32 %v503, 0.0
        %v590 = vmax.f32 %v508, 0.0
        %v591 = vmax.f32 %v513, 0.0
        %v592 = vmax.f32 %v518, 0.0
        %v593 = vmax.f32 %v523, 0.0
        %v594 = vmax.f32 %v528, 0.0
        %v595 = vmax.f32 %v533, 0.0
        %v596 = vmax.f32 %v538, 0.0
        %v597 = vmax.f32 %v543, 0.0
        %v598 = vmax.f32 %v548, 0.0
        %v599 = vmax.f32 %v553, 0.0
        %v600 = vmax.f32 %v558, 0.0
        %v601 = vmax.f32 %v563, 0.0
        %v602 = vmax.f32 %v568, 0.0
        %v603 = vld [vmem:[%s3] sm:$0x1]
        %v605 = vlaneseq
        %v606 = vshrl.u32 %v605, 7
        %v607 = vsub.s32 0, %v606
        %v608 = vrot.slane %v603, %v607
        %v610 = vmul.f32 %v571, %v608
        %v611 = vmul.f32 %v572, %v608
        %v612 = vmul.f32 %v573, %v608
        %v613 = vmul.f32 %v574, %v608
        %v614 = vmul.f32 %v575, %v608
        %v615 = vmul.f32 %v576, %v608
        %v616 = vmul.f32 %v577, %v608
        %v617 = vmul.f32 %v578, %v608
        %v618 = vmul.f32 %v579, %v608
        %v619 = vmul.f32 %v580, %v608
        %v620 = vmul.f32 %v581, %v608
        %v621 = vmul.f32 %v582, %v608
        %v622 = vmul.f32 %v583, %v608
        %v623 = vmul.f32 %v584, %v608
        %v624 = vmul.f32 %v585, %v608
        %v625 = vmul.f32 %v586, %v608
        %v626 = vmul.f32 %v587, %v608
        %v627 = vmul.f32 %v588, %v608
        %v628 = vmul.f32 %v589, %v608
        %v629 = vmul.f32 %v590, %v608
        %v630 = vmul.f32 %v591, %v608
        %v631 = vmul.f32 %v592, %v608
        %v632 = vmul.f32 %v593, %v608
        %v633 = vmul.f32 %v594, %v608
        %v634 = vmul.f32 %v595, %v608
        %v635 = vmul.f32 %v596, %v608
        %v636 = vmul.f32 %v597, %v608
        %v637 = vmul.f32 %v598, %v608
        %v638 = vmul.f32 %v599, %v608
        %v639 = vmul.f32 %v600, %v608
        %v640 = vmul.f32 %v601, %v608
        %v641 = vmul.f32 %v602, %v608
        %vm642 = vcmask 523264
        %v643 = vsel %vm642, %v610, 0.0
        %644 = vadd.xlane.f32.xlu0 %v643
        %v645 = vpop.xlane.xlu0 %644
        %v646 = vsel %vm642, %v611, 0.0
        %647 = vadd.xlane.f32.xlu0 %v646
        %v648 = vpop.xlane.xlu0 %647
        %v649 = vsel %vm642, %v612, 0.0
        %650 = vadd.xlane.f32.xlu0 %v649
        %v651 = vpop.xlane.xlu0 %650
        %v652 = vsel %vm642, %v613, 0.0
        %653 = vadd.xlane.f32.xlu0 %v652
        %v654 = vpop.xlane.xlu0 %653
        %v655 = vsel %vm642, %v614, 0.0
        %656 = vadd.xlane.f32.xlu0 %v655
        %v657 = vpop.xlane.xlu0 %656
        %v658 = vsel %vm642, %v615, 0.0
        %659 = vadd.xlane.f32.xlu0 %v658
        %v660 = vpop.xlane.xlu0 %659
        %v661 = vsel %vm642, %v616, 0.0
        %662 = vadd.xlane.f32.xlu0 %v661
        %v663 = vpop.xlane.xlu0 %662
        %v664 = vsel %vm642, %v617, 0.0
        %665 = vadd.xlane.f32.xlu0 %v664
        %v666 = vpop.xlane.xlu0 %665
        %v667 = vsel %vm642, %v618, 0.0
        %668 = vadd.xlane.f32.xlu0 %v667
        %v669 = vpop.xlane.xlu0 %668
        %v670 = vsel %vm642, %v619, 0.0
        %671 = vadd.xlane.f32.xlu0 %v670
        %v672 = vpop.xlane.xlu0 %671
        %v673 = vsel %vm642, %v620, 0.0
        %674 = vadd.xlane.f32.xlu0 %v673
        %v675 = vpop.xlane.xlu0 %674
        %v676 = vsel %vm642, %v621, 0.0
        %677 = vadd.xlane.f32.xlu0 %v676
        %v678 = vpop.xlane.xlu0 %677
        %v679 = vsel %vm642, %v622, 0.0
        %680 = vadd.xlane.f32.xlu0 %v679
        %v681 = vpop.xlane.xlu0 %680
        %v682 = vsel %vm642, %v623, 0.0
        %683 = vadd.xlane.f32.xlu0 %v682
        %v684 = vpop.xlane.xlu0 %683
        %v685 = vsel %vm642, %v624, 0.0
        %686 = vadd.xlane.f32.xlu0 %v685
        %v687 = vpop.xlane.xlu0 %686
        %v688 = vsel %vm642, %v625, 0.0
        %689 = vadd.xlane.f32.xlu0 %v688
        %v690 = vpop.xlane.xlu0 %689
        %v691 = vsel %vm642, %v626, 0.0
        %692 = vadd.xlane.f32.xlu0 %v691
        %v693 = vpop.xlane.xlu0 %692
        %v694 = vsel %vm642, %v627, 0.0
        %695 = vadd.xlane.f32.xlu0 %v694
        %v696 = vpop.xlane.xlu0 %695
        %v697 = vsel %vm642, %v628, 0.0
        %698 = vadd.xlane.f32.xlu0 %v697
        %v699 = vpop.xlane.xlu0 %698
        %v700 = vsel %vm642, %v629, 0.0
        %701 = vadd.xlane.f32.xlu0 %v700
        %v702 = vpop.xlane.xlu0 %701
        %v703 = vsel %vm642, %v630, 0.0
        %704 = vadd.xlane.f32.xlu0 %v703
        %v705 = vpop.xlane.xlu0 %704
        %v706 = vsel %vm642, %v631, 0.0
        %707 = vadd.xlane.f32.xlu0 %v706
        %v708 = vpop.xlane.xlu0 %707
        %v709 = vsel %vm642, %v632, 0.0
        %710 = vadd.xlane.f32.xlu0 %v709
        %v711 = vpop.xlane.xlu0 %710
        %v712 = vsel %vm642, %v633, 0.0
        %713 = vadd.xlane.f32.xlu0 %v712
        %v714 = vpop.xlane.xlu0 %713
        %v715 = vsel %vm642, %v634, 0.0
        %716 = vadd.xlane.f32.xlu0 %v715
        %v717 = vpop.xlane.xlu0 %716
        %v718 = vsel %vm642, %v635, 0.0
        %719 = vadd.xlane.f32.xlu0 %v718
        %v720 = vpop.xlane.xlu0 %719
        %v721 = vsel %vm642, %v636, 0.0
        %722 = vadd.xlane.f32.xlu0 %v721
        %v723 = vpop.xlane.xlu0 %722
        %v724 = vsel %vm642, %v637, 0.0
        %725 = vadd.xlane.f32.xlu0 %v724
        %v726 = vpop.xlane.xlu0 %725
        %v727 = vsel %vm642, %v638, 0.0
        %728 = vadd.xlane.f32.xlu0 %v727
        %v729 = vpop.xlane.xlu0 %728
        %v730 = vsel %vm642, %v639, 0.0
        %731 = vadd.xlane.f32.xlu0 %v730
        %v732 = vpop.xlane.xlu0 %731
        %v733 = vsel %vm642, %v640, 0.0
        %734 = vadd.xlane.f32.xlu0 %v733
        %v735 = vpop.xlane.xlu0 %734
        %v736 = vsel %vm642, %v641, 0.0
        %737 = vadd.xlane.f32.xlu0 %v736
        %v738 = vpop.xlane.xlu0 %737
        %v739 = vld [vmem:[#allocation2] sm:$0x1]
        %v741 = vlaneseq
        %v742 = vshrl.u32 %v741, 7
        %v743 = vsub.s32 0, %v742
        %v744 = vrot.slane %v739, %v743
        %v746 = vadd.f32 %v645, %v744
        %v747 = vadd.f32 %v648, %v744
        %v748 = vadd.f32 %v651, %v744
        %v749 = vadd.f32 %v654, %v744
        %v750 = vadd.f32 %v657, %v744
        %v751 = vadd.f32 %v660, %v744
        %v752 = vadd.f32 %v663, %v744
        %v753 = vadd.f32 %v666, %v744
        %v754 = vadd.f32 %v669, %v744
        %v755 = vadd.f32 %v672, %v744
        %v756 = vadd.f32 %v675, %v744
        %v757 = vadd.f32 %v678, %v744
        %v758 = vadd.f32 %v681, %v744
        %v759 = vadd.f32 %v684, %v744
        %v760 = vadd.f32 %v687, %v744
        %v761 = vadd.f32 %v690, %v744
        %v762 = vadd.f32 %v693, %v744
        %v763 = vadd.f32 %v696, %v744
        %v764 = vadd.f32 %v699, %v744
        %v765 = vadd.f32 %v702, %v744
        %v766 = vadd.f32 %v705, %v744
        %v767 = vadd.f32 %v708, %v744
        %v768 = vadd.f32 %v711, %v744
        %v769 = vadd.f32 %v714, %v744
        %v770 = vadd.f32 %v717, %v744
        %v771 = vadd.f32 %v720, %v744
        %v772 = vadd.f32 %v723, %v744
        %v773 = vadd.f32 %v726, %v744
        %v774 = vadd.f32 %v729, %v744
        %v775 = vadd.f32 %v732, %v744
        %v776 = vadd.f32 %v735, %v744
        %v777 = vadd.f32 %v738, %v744
        %vm778 = vcmask 7168
        %v779 = vsel %vm778, %v746, -inf
        %v780 = vsel %vm778, %v747, -inf
        %v781 = vmax.f32 %v779, %v780
        %v782 = vrot.slane %v781, 4
        %v783 = vmax.f32 %v781, %v782
        %v784 = vrot.slane %v783, 2
        %v785 = vmax.f32 %v783, %v784
        %v786 = vrot.slane %v785, 1
        %v787 = vmax.f32 %v785, %v786
        %v788 = vsel %vm778, %v748, -inf
        %v789 = vsel %vm778, %v749, -inf
        %v790 = vmax.f32 %v788, %v789
        %v791 = vrot.slane %v790, 4
        %v792 = vmax.f32 %v790, %v791
        %v793 = vrot.slane %v792, 2
        %v794 = vmax.f32 %v792, %v793
        %v795 = vrot.slane %v794, 1
        %v796 = vmax.f32 %v794, %v795
        %v797 = vsel %vm778, %v750, -inf
        %v798 = vsel %vm778, %v751, -inf
        %v799 = vmax.f32 %v797, %v798
        %v800 = vrot.slane %v799, 4
        %v801 = vmax.f32 %v799, %v800
        %v802 = vrot.slane %v801, 2
        %v803 = vmax.f32 %v801, %v802
        %v804 = vrot.slane %v803, 1
        %v805 = vmax.f32 %v803, %v804
        %v806 = vsel %vm778, %v752, -inf
        %v807 = vsel %vm778, %v753, -inf
        %v808 = vmax.f32 %v806, %v807
        %v809 = vrot.slane %v808, 4
        %v810 = vmax.f32 %v808, %v809
        %v811 = vrot.slane %v810, 2
        %v812 = vmax.f32 %v810, %v811
        %v813 = vrot.slane %v812, 1
        %v814 = vmax.f32 %v812, %v813
        %v815 = vsel %vm778, %v754, -inf
        %v816 = vsel %vm778, %v755, -inf
        %v817 = vmax.f32 %v815, %v816
        %v818 = vrot.slane %v817, 4
        %v819 = vmax.f32 %v817, %v818
        %v820 = vrot.slane %v819, 2
        %v821 = vmax.f32 %v819, %v820
        %v822 = vrot.slane %v821, 1
        %v823 = vmax.f32 %v821, %v822
        %v824 = vsel %vm778, %v756, -inf
        %v825 = vsel %vm778, %v757, -inf
        %v826 = vmax.f32 %v824, %v825
        %v827 = vrot.slane %v826, 4
        %v828 = vmax.f32 %v826, %v827
        %v829 = vrot.slane %v828, 2
        %v830 = vmax.f32 %v828, %v829
        %v831 = vrot.slane %v830, 1
        %v832 = vmax.f32 %v830, %v831
        %v833 = vsel %vm778, %v758, -inf
        %v834 = vsel %vm778, %v759, -inf
        %v835 = vmax.f32 %v833, %v834
        %v836 = vrot.slane %v835, 4
        %v837 = vmax.f32 %v835, %v836
        %v838 = vrot.slane %v837, 2
        %v839 = vmax.f32 %v837, %v838
        %v840 = vrot.slane %v839, 1
        %v841 = vmax.f32 %v839, %v840
        %v842 = vsel %vm778, %v760, -inf
        %v843 = vsel %vm778, %v761, -inf
        %v844 = vmax.f32 %v842, %v843
        %v845 = vrot.slane %v844, 4
        %v846 = vmax.f32 %v844, %v845
        %v847 = vrot.slane %v846, 2
        %v848 = vmax.f32 %v846, %v847
        %v849 = vrot.slane %v848, 1
        %v850 = vmax.f32 %v848, %v849
        %v851 = vsel %vm778, %v762, -inf
        %v852 = vsel %vm778, %v763, -inf
        %v853 = vmax.f32 %v851, %v852
        %v854 = vrot.slane %v853, 4
        %v855 = vmax.f32 %v853, %v854
        %v856 = vrot.slane %v855, 2
        %v857 = vmax.f32 %v855, %v856
        %v858 = vrot.slane %v857, 1
        %v859 = vmax.f32 %v857, %v858
        %v860 = vsel %vm778, %v764, -inf
        %v861 = vsel %vm778, %v765, -inf
        %v862 = vmax.f32 %v860, %v861
        %v863 = vrot.slane %v862, 4
        %v864 = vmax.f32 %v862, %v863
        %v865 = vrot.slane %v864, 2
        %v866 = vmax.f32 %v864, %v865
        %v867 = vrot.slane %v866, 1
        %v868 = vmax.f32 %v866, %v867
        %v869 = vsel %vm778, %v766, -inf
        %v870 = vsel %vm778, %v767, -inf
        %v871 = vmax.f32 %v869, %v870
        %v872 = vrot.slane %v871, 4
        %v873 = vmax.f32 %v871, %v872
        %v874 = vrot.slane %v873, 2
        %v875 = vmax.f32 %v873, %v874
        %v876 = vrot.slane %v875, 1
        %v877 = vmax.f32 %v875, %v876
        %v878 = vsel %vm778, %v768, -inf
        %v879 = vsel %vm778, %v769, -inf
        %v880 = vmax.f32 %v878, %v879
        %v881 = vrot.slane %v880, 4
        %v882 = vmax.f32 %v880, %v881
        %v883 = vrot.slane %v882, 2
        %v884 = vmax.f32 %v882, %v883
        %v885 = vrot.slane %v884, 1
        %v886 = vmax.f32 %v884, %v885
        %v887 = vsel %vm778, %v770, -inf
        %v888 = vsel %vm778, %v771, -inf
        %v889 = vmax.f32 %v887, %v888
        %v890 = vrot.slane %v889, 4
        %v891 = vmax.f32 %v889, %v890
        %v892 = vrot.slane %v891, 2
        %v893 = vmax.f32 %v891, %v892
        %v894 = vrot.slane %v893, 1
        %v895 = vmax.f32 %v893, %v894
        %v896 = vsel %vm778, %v772, -inf
        %v897 = vsel %vm778, %v773, -inf
        %v898 = vmax.f32 %v896, %v897
        %v899 = vrot.slane %v898, 4
        %v900 = vmax.f32 %v898, %v899
        %v901 = vrot.slane %v900, 2
        %v902 = vmax.f32 %v900, %v901
        %v903 = vrot.slane %v902, 1
        %v904 = vmax.f32 %v902, %v903
        %v905 = vsel %vm778, %v774, -inf
        %v906 = vsel %vm778, %v775, -inf
        %v907 = vmax.f32 %v905, %v906
        %v908 = vrot.slane %v907, 4
        %v909 = vmax.f32 %v907, %v908
        %v910 = vrot.slane %v909, 2
        %v911 = vmax.f32 %v909, %v910
        %v912 = vrot.slane %v911, 1
        %v913 = vmax.f32 %v911, %v912
        %v914 = vsel %vm778, %v776, -inf
        %v915 = vsel %vm778, %v777, -inf
        %v916 = vmax.f32 %v914, %v915
        %v917 = vrot.slane %v916, 4
        %v918 = vmax.f32 %v916, %v917
        %v919 = vrot.slane %v918, 2
        %v920 = vmax.f32 %v918, %v919
        %v921 = vrot.slane %v920, 1
        %v922 = vmax.f32 %v920, %v921
        %v923 = vsub.f32 %v746, %v787
        %v924 = vsub.f32 %v747, %v787
        %v925 = vsub.f32 %v748, %v796
        %v926 = vsub.f32 %v749, %v796
        %v927 = vsub.f32 %v750, %v805
        %v928 = vsub.f32 %v751, %v805
        %v929 = vsub.f32 %v752, %v814
        %v930 = vsub.f32 %v753, %v814
        %v931 = vsub.f32 %v754, %v823
        %v932 = vsub.f32 %v755, %v823
        %v933 = vsub.f32 %v756, %v832
        %v934 = vsub.f32 %v757, %v832
        %v935 = vsub.f32 %v758, %v841
        %v936 = vsub.f32 %v759, %v841
        %v937 = vsub.f32 %v760, %v850
        %v938 = vsub.f32 %v761, %v850
        %v939 = vsub.f32 %v762, %v859
        %v940 = vsub.f32 %v763, %v859
        %v941 = vsub.f32 %v764, %v868
        %v942 = vsub.f32 %v765, %v868
        %v943 = vsub.f32 %v766, %v877
        %v944 = vsub.f32 %v767, %v877
        %v945 = vsub.f32 %v768, %v886
        %v946 = vsub.f32 %v769, %v886
        %v947 = vsub.f32 %v770, %v895
        %v948 = vsub.f32 %v771, %v895
        %v949 = vsub.f32 %v772, %v904
        %v950 = vsub.f32 %v773, %v904
        %v951 = vsub.f32 %v774, %v913
        %v952 = vsub.f32 %v775, %v913
        %v953 = vsub.f32 %v776, %v922
        %v954 = vsub.f32 %v777, %v922
        %v955 = vmul.f32 %v923, 1.442695
        %v956 = vpow.pop %v955
        %v957 = vmul.f32 %v924, 1.442695
        %v958 = vpow.pop %v957
        %v959 = vmul.f32 %v925, 1.442695
        %v960 = vpow.pop %v959
        %v961 = vmul.f32 %v926, 1.442695
        %v962 = vpow.pop %v961
        %v963 = vmul.f32 %v927, 1.442695
        %v964 = vpow.pop %v963
        %v965 = vmul.f32 %v928, 1.442695
        %v966 = vpow.pop %v965
        %v967 = vmul.f32 %v929, 1.442695
        %v968 = vpow.pop %v967
        %v969 = vmul.f32 %v930, 1.442695
        %v970 = vpow.pop %v969
        %v971 = vmul.f32 %v931, 1.442695
        %v972 = vpow.pop %v971
        %v973 = vmul.f32 %v932, 1.442695
        %v974 = vpow.pop %v973
        %v975 = vmul.f32 %v933, 1.442695
        %v976 = vpow.pop %v975
        %v977 = vmul.f32 %v934, 1.442695
        %v978 = vpow.pop %v977
        %v979 = vmul.f32 %v935, 1.442695
        %v980 = vpow.pop %v979
        %v981 = vmul.f32 %v936, 1.442695
        %v982 = vpow.pop %v981
        %v983 = vmul.f32 %v937, 1.442695
        %v984 = vpow.pop %v983
        %v985 = vmul.f32 %v938, 1.442695
        %v986 = vpow.pop %v985
        %v987 = vmul.f32 %v939, 1.442695
        %v988 = vpow.pop %v987
        %v989 = vmul.f32 %v940, 1.442695
        %v990 = vpow.pop %v989
        %v991 = vmul.f32 %v941, 1.442695
        %v992 = vpow.pop %v991
        %v993 = vmul.f32 %v942, 1.442695
        %v994 = vpow.pop %v993
        %v995 = vmul.f32 %v943, 1.442695
        %v996 = vpow.pop %v995
        %v997 = vmul.f32 %v944, 1.442695
        %v998 = vpow.pop %v997
        %v999 = vmul.f32 %v945, 1.442695
        %v1000 = vpow.pop %v999
        %v1001 = vmul.f32 %v946, 1.442695
        %v1002 = vpow.pop %v1001
        %v1003 = vmul.f32 %v947, 1.442695
        %v1004 = vpow.pop %v1003
        %v1005 = vmul.f32 %v948, 1.442695
        %v1006 = vpow.pop %v1005
        %v1007 = vmul.f32 %v949, 1.442695
        %v1008 = vpow.pop %v1007
        %v1009 = vmul.f32 %v950, 1.442695
        %v1010 = vpow.pop %v1009
        %v1011 = vmul.f32 %v951, 1.442695
        %v1012 = vpow.pop %v1011
        %v1013 = vmul.f32 %v952, 1.442695
        %v1014 = vpow.pop %v1013
        %v1015 = vmul.f32 %v953, 1.442695
        %v1016 = vpow.pop %v1015
        %v1017 = vmul.f32 %v954, 1.442695
        %v1018 = vpow.pop %v1017
        %v1019 = vsel %vm778, %v956, 0.0
        %v1020 = vsel %vm778, %v958, 0.0
        %v1021 = vadd.f32 %v1019, %v1020
        %v1022 = vrot.slane %v1021, 4
        %v1023 = vadd.f32 %v1021, %v1022
        %v1024 = vrot.slane %v1023, 2
        %v1025 = vadd.f32 %v1023, %v1024
        %v1026 = vrot.slane %v1025, 1
        %v1027 = vadd.f32 %v1025, %v1026
        %v1028 = vsel %vm778, %v960, 0.0
        %v1029 = vsel %vm778, %v962, 0.0
        %v1030 = vadd.f32 %v1028, %v1029
        %v1031 = vrot.slane %v1030, 4
        %v1032 = vadd.f32 %v1030, %v1031
        %v1033 = vrot.slane %v1032, 2
        %v1034 = vadd.f32 %v1032, %v1033
        %v1035 = vrot.slane %v1034, 1
        %v1036 = vadd.f32 %v1034, %v1035
        %v1037 = vsel %vm778, %v964, 0.0
        %v1038 = vsel %vm778, %v966, 0.0
        %v1039 = vadd.f32 %v1037, %v1038
        %v1040 = vrot.slane %v1039, 4
        %v1041 = vadd.f32 %v1039, %v1040
        %v1042 = vrot.slane %v1041, 2
        %v1043 = vadd.f32 %v1041, %v1042
        %v1044 = vrot.slane %v1043, 1
        %v1045 = vadd.f32 %v1043, %v1044
        %v1046 = vsel %vm778, %v968, 0.0
        %v1047 = vsel %vm778, %v970, 0.0
        %v1048 = vadd.f32 %v1046, %v1047
        %v1049 = vrot.slane %v1048, 4
        %v1050 = vadd.f32 %v1048, %v1049
        %v1051 = vrot.slane %v1050, 2
        %v1052 = vadd.f32 %v1050, %v1051
        %v1053 = vrot.slane %v1052, 1
        %v1054 = vadd.f32 %v1052, %v1053
        %v1055 = vsel %vm778, %v972, 0.0
        %v1056 = vsel %vm778, %v974, 0.0
        %v1057 = vadd.f32 %v1055, %v1056
        %v1058 = vrot.slane %v1057, 4
        %v1059 = vadd.f32 %v1057, %v1058
        %v1060 = vrot.slane %v1059, 2
        %v1061 = vadd.f32 %v1059, %v1060
        %v1062 = vrot.slane %v1061, 1
        %v1063 = vadd.f32 %v1061, %v1062
        %v1064 = vsel %vm778, %v976, 0.0
        %v1065 = vsel %vm778, %v978, 0.0
        %v1066 = vadd.f32 %v1064, %v1065
        %v1067 = vrot.slane %v1066, 4
        %v1068 = vadd.f32 %v1066, %v1067
        %v1069 = vrot.slane %v1068, 2
        %v1070 = vadd.f32 %v1068, %v1069
        %v1071 = vrot.slane %v1070, 1
        %v1072 = vadd.f32 %v1070, %v1071
        %v1073 = vsel %vm778, %v980, 0.0
        %v1074 = vsel %vm778, %v982, 0.0
        %v1075 = vadd.f32 %v1073, %v1074
        %v1076 = vrot.slane %v1075, 4
        %v1077 = vadd.f32 %v1075, %v1076
        %v1078 = vrot.slane %v1077, 2
        %v1079 = vadd.f32 %v1077, %v1078
        %v1080 = vrot.slane %v1079, 1
        %v1081 = vadd.f32 %v1079, %v1080
        %v1082 = vsel %vm778, %v984, 0.0
        %v1083 = vsel %vm778, %v986, 0.0
        %v1084 = vadd.f32 %v1082, %v1083
        %v1085 = vrot.slane %v1084, 4
        %v1086 = vadd.f32 %v1084, %v1085
        %v1087 = vrot.slane %v1086, 2
        %v1088 = vadd.f32 %v1086, %v1087
        %v1089 = vrot.slane %v1088, 1
        %v1090 = vadd.f32 %v1088, %v1089
        %v1091 = vsel %vm778, %v988, 0.0
        %v1092 = vsel %vm778, %v990, 0.0
        %v1093 = vadd.f32 %v1091, %v1092
        %v1094 = vrot.slane %v1093, 4
        %v1095 = vadd.f32 %v1093, %v1094
        %v1096 = vrot.slane %v1095, 2
        %v1097 = vadd.f32 %v1095, %v1096
        %v1098 = vrot.slane %v1097, 1
        %v1099 = vadd.f32 %v1097, %v1098
        %v1100 = vsel %vm778, %v992, 0.0
        %v1101 = vsel %vm778, %v994, 0.0
        %v1102 = vadd.f32 %v1100, %v1101
        %v1103 = vrot.slane %v1102, 4
        %v1104 = vadd.f32 %v1102, %v1103
        %v1105 = vrot.slane %v1104, 2
        %v1106 = vadd.f32 %v1104, %v1105
        %v1107 = vrot.slane %v1106, 1
        %v1108 = vadd.f32 %v1106, %v1107
        %v1109 = vsel %vm778, %v996, 0.0
        %v1110 = vsel %vm778, %v998, 0.0
        %v1111 = vadd.f32 %v1109, %v1110
        %v1112 = vrot.slane %v1111, 4
        %v1113 = vadd.f32 %v1111, %v1112
        %v1114 = vrot.slane %v1113, 2
        %v1115 = vadd.f32 %v1113, %v1114
        %v1116 = vrot.slane %v1115, 1
        %v1117 = vadd.f32 %v1115, %v1116
        %v1118 = vsel %vm778, %v1000, 0.0
        %v1119 = vsel %vm778, %v1002, 0.0
        %v1120 = vadd.f32 %v1118, %v1119
        %v1121 = vrot.slane %v1120, 4
        %v1122 = vadd.f32 %v1120, %v1121
        %v1123 = vrot.slane %v1122, 2
        %v1124 = vadd.f32 %v1122, %v1123
        %v1125 = vrot.slane %v1124, 1
        %v1126 = vadd.f32 %v1124, %v1125
        %v1127 = vsel %vm778, %v1004, 0.0
        %v1128 = vsel %vm778, %v1006, 0.0
        %v1129 = vadd.f32 %v1127, %v1128
        %v1130 = vrot.slane %v1129, 4
        %v1131 = vadd.f32 %v1129, %v1130
        %v1132 = vrot.slane %v1131, 2
        %v1133 = vadd.f32 %v1131, %v1132
        %v1134 = vrot.slane %v1133, 1
        %v1135 = vadd.f32 %v1133, %v1134
        %v1136 = vsel %vm778, %v1008, 0.0
        %v1137 = vsel %vm778, %v1010, 0.0
        %v1138 = vadd.f32 %v1136, %v1137
        %v1139 = vrot.slane %v1138, 4
        %v1140 = vadd.f32 %v1138, %v1139
        %v1141 = vrot.slane %v1140, 2
        %v1142 = vadd.f32 %v1140, %v1141
        %v1143 = vrot.slane %v1142, 1
        %v1144 = vadd.f32 %v1142, %v1143
        %v1145 = vsel %vm778, %v1012, 0.0
        %v1146 = vsel %vm778, %v1014, 0.0
        %v1147 = vadd.f32 %v1145, %v1146
        %v1148 = vrot.slane %v1147, 4
        %v1149 = vadd.f32 %v1147, %v1148
        %v1150 = vrot.slane %v1149, 2
        %v1151 = vadd.f32 %v1149, %v1150
        %v1152 = vrot.slane %v1151, 1
        %v1153 = vadd.f32 %v1151, %v1152
        %v1154 = vsel %vm778, %v1016, 0.0
        %v1155 = vsel %vm778, %v1018, 0.0
        %v1156 = vadd.f32 %v1154, %v1155
        %v1157 = vrot.slane %v1156, 4
        %v1158 = vadd.f32 %v1156, %v1157
        %v1159 = vrot.slane %v1158, 2
        %v1160 = vadd.f32 %v1158, %v1159
        %v1161 = vrot.slane %v1160, 1
        %v1162 = vadd.f32 %v1160, %v1161
        %v1163 = vrcp.pop %v1027
        %v1164 = vmul.f32 %v956, %v1163
        %v1165 = vmul.f32 %v958, %v1163
        %v1166 = vrcp.pop %v1036
        %v1167 = vmul.f32 %v960, %v1166
        %v1168 = vmul.f32 %v962, %v1166
        %v1169 = vrcp.pop %v1045
        %v1170 = vmul.f32 %v964, %v1169
        %v1171 = vmul.f32 %v966, %v1169
        %v1172 = vrcp.pop %v1054
        %v1173 = vmul.f32 %v968, %v1172
        %v1174 = vmul.f32 %v970, %v1172
        %v1175 = vrcp.pop %v1063
        %v1176 = vmul.f32 %v972, %v1175
        %v1177 = vmul.f32 %v974, %v1175
        %v1178 = vrcp.pop %v1072
        %v1179 = vmul.f32 %v976, %v1178
        %v1180 = vmul.f32 %v978, %v1178
        %v1181 = vrcp.pop %v1081
        %v1182 = vmul.f32 %v980, %v1181
        %v1183 = vmul.f32 %v982, %v1181
        %v1184 = vrcp.pop %v1090
        %v1185 = vmul.f32 %v984, %v1184
        %v1186 = vmul.f32 %v986, %v1184
        %v1187 = vrcp.pop %v1099
        %v1188 = vmul.f32 %v988, %v1187
        %v1189 = vmul.f32 %v990, %v1187
        %v1190 = vrcp.pop %v1108
        %v1191 = vmul.f32 %v992, %v1190
        %v1192 = vmul.f32 %v994, %v1190
        %v1193 = vrcp.pop %v1117
        %v1194 = vmul.f32 %v996, %v1193
        %v1195 = vmul.f32 %v998, %v1193
        %v1196 = vrcp.pop %v1126
        %v1197 = vmul.f32 %v1000, %v1196
        %v1198 = vmul.f32 %v1002, %v1196
        %v1199 = vrcp.pop %v1135
        %v1200 = vmul.f32 %v1004, %v1199
        %v1201 = vmul.f32 %v1006, %v1199
        %v1202 = vrcp.pop %v1144
        %v1203 = vmul.f32 %v1008, %v1202
        %v1204 = vmul.f32 %v1010, %v1202
        %v1205 = vrcp.pop %v1153
        %v1206 = vmul.f32 %v1012, %v1205
        %v1207 = vmul.f32 %v1014, %v1205
        %v1208 = vrcp.pop %v1162
        %v1209 = vmul.f32 %v1016, %v1208
        %v1210 = vmul.f32 %v1018, %v1208
        %1212 = vset.pattern.permute.xlu0 0
        %1213 = vperm.xlu0 %1212, %v1164
        %v1214 = vpop.permute.xlu0 %1213
        %1217 = vset.pattern.permute.xlu0 0
        %1218 = vperm.xlu0 %1217, %v1165
        %v1219 = vpop.permute.xlu0 %1218
        %1222 = vset.pattern.permute.xlu0 0
        %1223 = vperm.xlu0 %1222, %v1167
        %v1224 = vpop.permute.xlu0 %1223
        %1227 = vset.pattern.permute.xlu0 0
        %1228 = vperm.xlu0 %1227, %v1168
        %v1229 = vpop.permute.xlu0 %1228
        %1232 = vset.pattern.permute.xlu0 0
        %1233 = vperm.xlu0 %1232, %v1170
        %v1234 = vpop.permute.xlu0 %1233
        %1237 = vset.pattern.permute.xlu0 0
        %1238 = vperm.xlu0 %1237, %v1171
        %v1239 = vpop.permute.xlu0 %1238
        %1242 = vset.pattern.permute.xlu0 0
        %1243 = vperm.xlu0 %1242, %v1173
        %v1244 = vpop.permute.xlu0 %1243
        %1247 = vset.pattern.permute.xlu0 0
        %1248 = vperm.xlu0 %1247, %v1174
        %v1249 = vpop.permute.xlu0 %1248
        %1252 = vset.pattern.permute.xlu0 0
        %1253 = vperm.xlu0 %1252, %v1176
        %v1254 = vpop.permute.xlu0 %1253
        %1257 = vset.pattern.permute.xlu0 0
        %1258 = vperm.xlu0 %1257, %v1177
        %v1259 = vpop.permute.xlu0 %1258
        %1262 = vset.pattern.permute.xlu0 0
        %1263 = vperm.xlu0 %1262, %v1179
        %v1264 = vpop.permute.xlu0 %1263
        %1267 = vset.pattern.permute.xlu0 0
        %1268 = vperm.xlu0 %1267, %v1180
        %v1269 = vpop.permute.xlu0 %1268
        %1272 = vset.pattern.permute.xlu0 0
        %1273 = vperm.xlu0 %1272, %v1182
        %v1274 = vpop.permute.xlu0 %1273
        %1277 = vset.pattern.permute.xlu0 0
        %1278 = vperm.xlu0 %1277, %v1183
        %v1279 = vpop.permute.xlu0 %1278
        %1282 = vset.pattern.permute.xlu0 0
        %1283 = vperm.xlu0 %1282, %v1185
        %v1284 = vpop.permute.xlu0 %1283
        %1287 = vset.pattern.permute.xlu0 0
        %1288 = vperm.xlu0 %1287, %v1186
        %v1289 = vpop.permute.xlu0 %1288
        %1292 = vset.pattern.permute.xlu0 0
        %1293 = vperm.xlu0 %1292, %v1188
        %v1294 = vpop.permute.xlu0 %1293
        %1297 = vset.pattern.permute.xlu0 0
        %1298 = vperm.xlu0 %1297, %v1189
        %v1299 = vpop.permute.xlu0 %1298
        %1302 = vset.pattern.permute.xlu0 0
        %1303 = vperm.xlu0 %1302, %v1191
        %v1304 = vpop.permute.xlu0 %1303
        %1307 = vset.pattern.permute.xlu0 0
        %1308 = vperm.xlu0 %1307, %v1192
        %v1309 = vpop.permute.xlu0 %1308
        %1312 = vset.pattern.permute.xlu0 0
        %1313 = vperm.xlu0 %1312, %v1194
        %v1314 = vpop.permute.xlu0 %1313
        %1317 = vset.pattern.permute.xlu0 0
        %1318 = vperm.xlu0 %1317, %v1195
        %v1319 = vpop.permute.xlu0 %1318
        %1322 = vset.pattern.permute.xlu0 0
        %1323 = vperm.xlu0 %1322, %v1197
        %v1324 = vpop.permute.xlu0 %1323
        %1327 = vset.pattern.permute.xlu0 0
        %1328 = vperm.xlu0 %1327, %v1198
        %v1329 = vpop.permute.xlu0 %1328
        %1332 = vset.pattern.permute.xlu0 0
        %1333 = vperm.xlu0 %1332, %v1200
        %v1334 = vpop.permute.xlu0 %1333
        %1337 = vset.pattern.permute.xlu0 0
        %1338 = vperm.xlu0 %1337, %v1201
        %v1339 = vpop.permute.xlu0 %1338
        %1342 = vset.pattern.permute.xlu0 0
        %1343 = vperm.xlu0 %1342, %v1203
        %v1344 = vpop.permute.xlu0 %1343
        %1347 = vset.pattern.permute.xlu0 0
        %1348 = vperm.xlu0 %1347, %v1204
        %v1349 = vpop.permute.xlu0 %1348
        %1352 = vset.pattern.permute.xlu0 0
        %1353 = vperm.xlu0 %1352, %v1206
        %v1354 = vpop.permute.xlu0 %1353
        %1357 = vset.pattern.permute.xlu0 0
        %1358 = vperm.xlu0 %1357, %v1207
        %v1359 = vpop.permute.xlu0 %1358
        %1362 = vset.pattern.permute.xlu0 0
        %1363 = vperm.xlu0 %1362, %v1209
        %v1364 = vpop.permute.xlu0 %1363
        %1367 = vset.pattern.permute.xlu0 0
        %1368 = vperm.xlu0 %1367, %v1210
        %v1369 = vpop.permute.xlu0 %1368
        %v1371 = vmul.f32 %v291, %v1214
        %v1372 = vmul.f32 %v292, %v1219
        %v1373 = vmul.f32 %v293, %v1224
        %v1374 = vmul.f32 %v294, %v1229
        %v1375 = vmul.f32 %v295, %v1234
        %v1376 = vmul.f32 %v296, %v1239
        %v1377 = vmul.f32 %v297, %v1244
        %v1378 = vmul.f32 %v298, %v1249
        %v1379 = vmul.f32 %v299, %v1254
        %v1380 = vmul.f32 %v300, %v1259
        %v1381 = vmul.f32 %v301, %v1264
        %v1382 = vmul.f32 %v302, %v1269
        %v1383 = vmul.f32 %v303, %v1274
        %v1384 = vmul.f32 %v304, %v1279
        %v1385 = vmul.f32 %v305, %v1284
        %v1386 = vmul.f32 %v306, %v1289
        %v1387 = vmul.f32 %v307, %v1294
        %v1388 = vmul.f32 %v308, %v1299
        %v1389 = vmul.f32 %v309, %v1304
        %v1390 = vmul.f32 %v310, %v1309
        %v1391 = vmul.f32 %v311, %v1314
        %v1392 = vmul.f32 %v312, %v1319
        %v1393 = vmul.f32 %v313, %v1324
        %v1394 = vmul.f32 %v314, %v1329
        %v1395 = vmul.f32 %v315, %v1334
        %v1396 = vmul.f32 %v316, %v1339
        %v1397 = vmul.f32 %v317, %v1344
        %v1398 = vmul.f32 %v318, %v1349
        %v1399 = vmul.f32 %v319, %v1354
        %v1400 = vmul.f32 %v320, %v1359
        %v1401 = vmul.f32 %v321, %v1364
        %v1402 = vmul.f32 %v322, %v1369
        %v1403 = vadd.f32 %v1371, %v1372
        %v1404 = vrot.slane %v1403, 4
        %v1405 = vadd.f32 %v1403, %v1404
        %v1406 = vrot.slane %v1405, 2
        %v1407 = vadd.f32 %v1405, %v1406
        %v1408 = vrot.slane %v1407, 1
        %v1409 = vadd.f32 %v1407, %v1408
        %v1410 = vadd.f32 %v1373, %v1374
        %v1411 = vrot.slane %v1410, 4
        %v1412 = vadd.f32 %v1410, %v1411
        %v1413 = vrot.slane %v1412, 2
        %v1414 = vadd.f32 %v1412, %v1413
        %v1415 = vrot.slane %v1414, 1
        %v1416 = vadd.f32 %v1414, %v1415
        %v1417 = vadd.f32 %v1375, %v1376
        %v1418 = vrot.slane %v1417, 4
        %v1419 = vadd.f32 %v1417, %v1418
        %v1420 = vrot.slane %v1419, 2
        %v1421 = vadd.f32 %v1419, %v1420
        %v1422 = vrot.slane %v1421, 1
        %v1423 = vadd.f32 %v1421, %v1422
        %v1424 = vadd.f32 %v1377, %v1378
        %v1425 = vrot.slane %v1424, 4
        %v1426 = vadd.f32 %v1424, %v1425
        %v1427 = vrot.slane %v1426, 2
        %v1428 = vadd.f32 %v1426, %v1427
        %v1429 = vrot.slane %v1428, 1
        %v1430 = vadd.f32 %v1428, %v1429
        %v1431 = vadd.f32 %v1379, %v1380
        %v1432 = vrot.slane %v1431, 4
        %v1433 = vadd.f32 %v1431, %v1432
        %v1434 = vrot.slane %v1433, 2
        %v1435 = vadd.f32 %v1433, %v1434
        %v1436 = vrot.slane %v1435, 1
        %v1437 = vadd.f32 %v1435, %v1436
        %v1438 = vadd.f32 %v1381, %v1382
        %v1439 = vrot.slane %v1438, 4
        %v1440 = vadd.f32 %v1438, %v1439
        %v1441 = vrot.slane %v1440, 2
        %v1442 = vadd.f32 %v1440, %v1441
        %v1443 = vrot.slane %v1442, 1
        %v1444 = vadd.f32 %v1442, %v1443
        %v1445 = vadd.f32 %v1383, %v1384
        %v1446 = vrot.slane %v1445, 4
        %v1447 = vadd.f32 %v1445, %v1446
        %v1448 = vrot.slane %v1447, 2
        %v1449 = vadd.f32 %v1447, %v1448
        %v1450 = vrot.slane %v1449, 1
        %v1451 = vadd.f32 %v1449, %v1450
        %v1452 = vadd.f32 %v1385, %v1386
        %v1453 = vrot.slane %v1452, 4
        %v1454 = vadd.f32 %v1452, %v1453
        %v1455 = vrot.slane %v1454, 2
        %v1456 = vadd.f32 %v1454, %v1455
        %v1457 = vrot.slane %v1456, 1
        %v1458 = vadd.f32 %v1456, %v1457
        %v1459 = vadd.f32 %v1387, %v1388
        %v1460 = vrot.slane %v1459, 4
        %v1461 = vadd.f32 %v1459, %v1460
        %v1462 = vrot.slane %v1461, 2
        %v1463 = vadd.f32 %v1461, %v1462
        %v1464 = vrot.slane %v1463, 1
        %v1465 = vadd.f32 %v1463, %v1464
        %v1466 = vadd.f32 %v1389, %v1390
        %v1467 = vrot.slane %v1466, 4
        %v1468 = vadd.f32 %v1466, %v1467
        %v1469 = vrot.slane %v1468, 2
        %v1470 = vadd.f32 %v1468, %v1469
        %v1471 = vrot.slane %v1470, 1
        %v1472 = vadd.f32 %v1470, %v1471
        %v1473 = vadd.f32 %v1391, %v1392
        %v1474 = vrot.slane %v1473, 4
        %v1475 = vadd.f32 %v1473, %v1474
        %v1476 = vrot.slane %v1475, 2
        %v1477 = vadd.f32 %v1475, %v1476
        %v1478 = vrot.slane %v1477, 1
        %v1479 = vadd.f32 %v1477, %v1478
        %v1480 = vadd.f32 %v1393, %v1394
        %v1481 = vrot.slane %v1480, 4
        %v1482 = vadd.f32 %v1480, %v1481
        %v1483 = vrot.slane %v1482, 2
        %v1484 = vadd.f32 %v1482, %v1483
        %v1485 = vrot.slane %v1484, 1
        %v1486 = vadd.f32 %v1484, %v1485
        %v1487 = vadd.f32 %v1395, %v1396
        %v1488 = vrot.slane %v1487, 4
        %v1489 = vadd.f32 %v1487, %v1488
        %v1490 = vrot.slane %v1489, 2
        %v1491 = vadd.f32 %v1489, %v1490
        %v1492 = vrot.slane %v1491, 1
        %v1493 = vadd.f32 %v1491, %v1492
        %v1494 = vadd.f32 %v1397, %v1398
        %v1495 = vrot.slane %v1494, 4
        %v1496 = vadd.f32 %v1494, %v1495
        %v1497 = vrot.slane %v1496, 2
        %v1498 = vadd.f32 %v1496, %v1497
        %v1499 = vrot.slane %v1498, 1
        %v1500 = vadd.f32 %v1498, %v1499
        %v1501 = vadd.f32 %v1399, %v1400
        %v1502 = vrot.slane %v1501, 4
        %v1503 = vadd.f32 %v1501, %v1502
        %v1504 = vrot.slane %v1503, 2
        %v1505 = vadd.f32 %v1503, %v1504
        %v1506 = vrot.slane %v1505, 1
        %v1507 = vadd.f32 %v1505, %v1506
        %v1508 = vadd.f32 %v1401, %v1402
        %v1509 = vrot.slane %v1508, 4
        %v1510 = vadd.f32 %v1508, %v1509
        %v1511 = vrot.slane %v1510, 2
        %v1512 = vadd.f32 %v1510, %v1511
        %v1513 = vrot.slane %v1512, 1
        %v1514 = vadd.f32 %v1512, %v1513
        %vm1531 = vcmask 1041409
        %v1532 = vsel %vm1531, %v1416, %v1409
        %vm1533 = vcmask 1042434
        %v1534 = vsel %vm1533, %v1423, %v1532
        %vm1535 = vcmask 1043459
        %v1536 = vsel %vm1535, %v1430, %v1534
        %vm1537 = vcmask 1044484
        %v1538 = vsel %vm1537, %v1437, %v1536
        %vm1539 = vcmask 1045509
        %v1540 = vsel %vm1539, %v1444, %v1538
        %vm1541 = vcmask 1046534
        %v1542 = vsel %vm1541, %v1451, %v1540
        %vm1543 = vcmask 1047559
        %v1544 = vsel %vm1543, %v1458, %v1542
        %v1545 = vsel %vm1531, %v1472, %v1465
        %v1546 = vsel %vm1533, %v1479, %v1545
        %v1547 = vsel %vm1535, %v1486, %v1546
        %v1548 = vsel %vm1537, %v1493, %v1547
        %v1549 = vsel %vm1539, %v1500, %v1548
        %v1550 = vsel %vm1541, %v1507, %v1549
        %v1551 = vsel %vm1543, %v1514, %v1550
        %1554 = vst [vmem:[%s273] sm:$0xff] %v1544
        %1555 = vst [vmem:[%s273 + $0x8] sm:$0xff] %v1551
        %1556 = vst.msk [vmem:[%s289] sm:$0xff] %vm778, %v1164
        %1557 = vst.msk [vmem:[%s289 + $0x8] sm:$0xff] %vm778, %v1165
        %1558 = vst.msk [vmem:[%s289 + $0x10] sm:$0xff] %vm778, %v1167
        %1559 = vst.msk [vmem:[%s289 + $0x18] sm:$0xff] %vm778, %v1168
        %1560 = vst.msk [vmem:[%s289 + $0x20] sm:$0xff] %vm778, %v1170
        %1561 = vst.msk [vmem:[%s289 + $0x28] sm:$0xff] %vm778, %v1171
        %1562 = vst.msk [vmem:[%s289 + $0x30] sm:$0xff] %vm778, %v1173
        %1563 = vst.msk [vmem:[%s289 + $0x38] sm:$0xff] %vm778, %v1174
        %1564 = vst.msk [vmem:[%s289 + $0x40] sm:$0xff] %vm778, %v1176
        %1565 = vst.msk [vmem:[%s289 + $0x48] sm:$0xff] %vm778, %v1177
        %1566 = vst.msk [vmem:[%s289 + $0x50] sm:$0xff] %vm778, %v1179
        %1567 = vst.msk [vmem:[%s289 + $0x58] sm:$0xff] %vm778, %v1180
        %1568 = vst.msk [vmem:[%s289 + $0x60] sm:$0xff] %vm778, %v1182
        %1569 = vst.msk [vmem:[%s289 + $0x68] sm:$0xff] %vm778, %v1183
        %1570 = vst.msk [vmem:[%s289 + $0x70] sm:$0xff] %vm778, %v1185
        %1571 = vst.msk [vmem:[%s289 + $0x78] sm:$0xff] %vm778, %v1186
        %1572 = vst.msk [vmem:[%s289 + $0x80] sm:$0xff] %vm778, %v1188
        %1573 = vst.msk [vmem:[%s289 + $0x88] sm:$0xff] %vm778, %v1189
        %1574 = vst.msk [vmem:[%s289 + $0x90] sm:$0xff] %vm778, %v1191
        %1575 = vst.msk [vmem:[%s289 + $0x98] sm:$0xff] %vm778, %v1192
        %1576 = vst.msk [vmem:[%s289 + $0xa0] sm:$0xff] %vm778, %v1194
        %1577 = vst.msk [vmem:[%s289 + $0xa8] sm:$0xff] %vm778, %v1195
        %1578 = vst.msk [vmem:[%s289 + $0xb0] sm:$0xff] %vm778, %v1197
        %1579 = vst.msk [vmem:[%s289 + $0xb8] sm:$0xff] %vm778, %v1198
        %1580 = vst.msk [vmem:[%s289 + $0xc0] sm:$0xff] %vm778, %v1200
        %1581 = vst.msk [vmem:[%s289 + $0xc8] sm:$0xff] %vm778, %v1201
        %1582 = vst.msk [vmem:[%s289 + $0xd0] sm:$0xff] %vm778, %v1203
        %1583 = vst.msk [vmem:[%s289 + $0xd8] sm:$0xff] %vm778, %v1204
        %1584 = vst.msk [vmem:[%s289 + $0xe0] sm:$0xff] %vm778, %v1206
        %1585 = vst.msk [vmem:[%s289 + $0xe8] sm:$0xff] %vm778, %v1207
        %1586 = vst.msk [vmem:[%s289 + $0xf0] sm:$0xff] %vm778, %v1209
        %1587 = vst.msk [vmem:[%s289 + $0xf8] sm:$0xff] %vm778, %v1210
        %s1588 = sand.u32 %s144, 1
        %s1589 = scalar_lea.sflag [#allocation5], %s1588
        %s1590 = sand.u32 %s144, 1
        %s1591 = smul.addr %s1590, 16
        %s1592 = scalar_lea.vmem [#allocation6], %s1591
        %s1593 = smul.u32 16, %s26
        %p1594 = scmp.lt.s32.totalorder %s1593, 63
        %s1595 = scalar_select %p1594, %s1593, 63
        %s1596 = smul.addr %s1595, 2
        %s1597 = smul.addr %s1596, 8
        %s1598 = scalar_lea.vmem %s6, %s1597
        // Predicated region
        $region45: #{self_attention.1} parent=39 // pred_check
          %p1599 = pneg %p154
        $region46: #{self_attention.1} parent=39 // pred_check_branch
          %1601 = sbr.rel (%p1599) target = $region48
        $region47: #{self_attention.1} parent=39 // pred_region
          %s1602 = smul.u32 2, %s26
          %s1604 = ssub.s32 256, 256
          %1605 = vsyncadd %s1589, %s1604
          %s1606 = smul.addr %s1602, 128
          %s1607 = scalar_lea.hbm %s5, %s1606
          %s1608 = sshll.u32 %s1592, 4
          %s1609 = int_to_ptr.vmem [resolvable:$true] %s1608
          %1614 = dma.vmem_to_hbm [thread:$0]  %s1609, 256, %s1607, %s1589, 128, 128, 8
        $region48: #{self_attention.1} parent=39 // pred_fallthru
          _
        // Predicated region
        $region49: #{self_attention.1} parent=39 // pred_check
          %p1615 = pneg %p180
        $region50: #{self_attention.1} parent=39 // pred_check_branch
          %1617 = sbr.rel (%p1615) target = $region52
        $region51: #{self_attention.1} parent=39 // pred_region
          %s1618 = smul.u32 16, %s26
        $region52: #{self_attention.1} parent=39 // pred_fallthru
          _
      $region40: #{self_attention.1} parent=5 // pred_fallthru
        _
      %p1619 = scmp.le.s32.totalorder 2, %s21
      // Predicated region
      $region53: #{self_attention.1} parent=5 // pred_check
        %p1620 = pneg %p1619
      $region54: #{self_attention.1} parent=5 // pred_check_branch
        %1622 = sbr.rel (%p1620) target = $region56
      $region55: #{self_attention.1} parent=5 // pred_region
        %s1623 = ssub.s32 %s21, 2
        // Predicated region
        $region57: #{self_attention.1} parent=55 // pred_check
          %p1624 = pneg %p160
        $region58: #{self_attention.1} parent=55 // pred_check_branch
          %1626 = sbr.rel (%p1624) target = $region60
        $region59: #{self_attention.1} parent=55 // pred_region
          %s1627 = sand.u32 %s145, 1
          %s1628 = scalar_lea.sflag [#allocation5], %s1627
          %s1629 = sand.u32 %s145, 1
          %s1630 = smul.addr %s1629, 16
          %s1631 = scalar_lea.vmem [#allocation6], %s1630
          %1632 = dma.done %s1628, 256
        $region60: #{self_attention.1} parent=55 // pred_fallthru
          _
        // Predicated region
        $region61: #{self_attention.1} parent=55 // pred_check
          %p1633 = pneg %p186
        $region62: #{self_attention.1} parent=55 // pred_check_branch
          %1635 = sbr.rel (%p1633) target = $region64
        $region63: #{self_attention.1} parent=55 // pred_region
          %s1636 = smul.u32 16, %s27
          %p1637 = scmp.lt.s32.totalorder %s1636, 63
          %s1638 = scalar_select %p1637, %s1636, 63
          %s1639 = smul.addr %s1638, 2
          %s1640 = smul.addr %s1639, 8
          %s1641 = scalar_lea.vmem %s6, %s1640
        $region64: #{self_attention.1} parent=55 // pred_fallthru
          _
      $region56: #{self_attention.1} parent=5 // pred_fallthru
        _
    $region6: #{self_attention.1} parent=1 // loop_footer
      %s25 = sadd.s32 1, %s21
    $region7: #{self_attention.1} parent=1 // loop_footer_branch
      %20 = sbr.rel target = $region3
    $region8: #{self_attention.1} parent=1 // loop_exit
      _
    %1642 = vsyncpa [#allocation4], 1
    %s1643 = scalar_lea.sflag [#allocation4], 1
    %1644 = vsyncpa %s1643, 1
    %1645 = vsyncpa [#allocation5], 1
    %s1646 = scalar_lea.sflag [#allocation5], 1
    %1647 = vsyncpa %s1646, 1

</llo_original>
